<compile_context>
chip_gen: v7x
topology: tpu7x:2x2x1
jax: 0.10.0
libtpu: 0.0.40
codegen_flags: <defaults>
</compile_context>

<pallas_src>
import functools

import jax
import jax.numpy as jnp
import numpy as np
from jax import lax
from jax.experimental import pallas as pl
from jax.experimental.pallas import tpu as pltpu


def _round8(n):
    return -(-n // 8) * 8


def _slab_offsets(num_layers, input_size, hidden_size):
    """Static row offsets of each weight segment in the packed (rows, 4H) slab."""
    H = hidden_size
    offs = {}
    r = 0
    offs["wih0"] = r; r += _round8(input_size)     # (input_size, 4H)
    offs["whh0"] = r; r += _round8(H)              # (H, 4H)
    offs["b0"] = r;   r += 8                       # row 0 = bih0 + bhh0
    offs["layers"] = []
    for _ in range(1, num_layers):
        o = {}
        o["wih"] = r; r += _round8(H)              # (H, 4H)
        o["whh"] = r; r += _round8(H)              # (H, 4H)
        o["b"] = r;   r += 8                       # row 0 = bih_l + bhh_l
        offs["layers"].append(o)
    offs["wfc"] = r; r += _round8(H)               # (H, classes) in cols [0, classes)
    offs["bfc"] = r; r += 8                        # row 0, cols [0, classes)
    offs["rows"] = r
    return offs


def pack_comb_weights(wih, whh, bih, bhh, wfc, bfc,
                      num_layers, input_size, hidden_size, classes):
    """Glue: pre-transpose / fold biases / pack everything into one f32 slab."""
    H = hidden_size
    G = 4 * H
    assert classes <= G, "FC output padded into the 4H-lane slab"
    offs = _slab_offsets(num_layers, input_size, hidden_size)
    slab = np.zeros((offs["rows"], G), np.float32)
    slab[offs["wih0"]:offs["wih0"] + input_size, :] = np.asarray(wih[0]).T
    slab[offs["whh0"]:offs["whh0"] + H, :] = np.asarray(whh[0]).T
    slab[offs["b0"], :] = np.asarray(bih[0]) + np.asarray(bhh[0])
    for i, o in enumerate(offs["layers"]):
        l = i + 1
        slab[o["wih"]:o["wih"] + H, :] = np.asarray(wih[l]).T
        slab[o["whh"]:o["whh"] + H, :] = np.asarray(whh[l]).T
        slab[o["b"], :] = np.asarray(bih[l]) + np.asarray(bhh[l])
    slab[offs["wfc"]:offs["wfc"] + H, :classes] = np.asarray(wfc).T
    slab[offs["bfc"], :classes] = np.asarray(bfc)
    return jnp.asarray(slab)


def make_comb_kernel(num_layers, seq_len, input_size, hidden_size, classes, offs):
    L, T, H, C = num_layers, seq_len, hidden_size, classes

    def kernel(ids_ref, emb_ref, slab_ref, out_ref, g0_ref, htop_ref):
        V = emb_ref.shape[0]

        # ------- static slab slices (one slab DMA; loads are one-time) -------
        wih0 = slab_ref[offs["wih0"]:offs["wih0"] + input_size, :]           # f32
        whh0 = slab_ref[offs["whh0"]:offs["whh0"] + H, :].astype(jnp.bfloat16)
        b0   = slab_ref[offs["b0"]:offs["b0"] + 1, :]
        wih_l, whh_l, b_l = [], [], []
        for o in offs["layers"]:
            wih_l.append(slab_ref[o["wih"]:o["wih"] + H, :].astype(jnp.bfloat16))
            whh_l.append(slab_ref[o["whh"]:o["whh"] + H, :].astype(jnp.bfloat16))
            b_l.append(slab_ref[o["b"]:o["b"] + 1, :])
        wfc = slab_ref[offs["wfc"]:offs["wfc"] + H, 0:C]
        bfc = slab_ref[offs["bfc"]:offs["bfc"] + 1, 0:C]

        # ------- prologue, all off the serial recurrence ---------------------
        ids = ids_ref[...]                                             # (T, 1) int32
        onehot = (lax.broadcasted_iota(jnp.int32, (T, V), 1) == ids
                  ).astype(jnp.float32)                                # (T, V)
        x = jnp.dot(onehot, emb_ref[...],
                    preferred_element_type=jnp.float32)                # (T, in)
        # Layer-0 input gates for every step in one MXU op, staged in VMEM.
        g0_ref[...] = jnp.dot(x, wih0,
                              preferred_element_type=jnp.float32) + b0  # (T, 4H)

        def lstm_cell(gates, c_prev):
            # Two full-width (1,4H) EUP pushes, then lane slices (i,f,g,o order).
            sg = jax.nn.sigmoid(gates)
            th = jnp.tanh(gates)
            i_g = sg[:, 0:H]
            f_g = sg[:, H:2 * H]
            g_g = th[:, 2 * H:3 * H]
            o_g = sg[:, 3 * H:4 * H]
            c_new = f_g * c_prev + i_g * g_g
            h_new = o_g * jnp.tanh(c_new)
            return h_new, c_new

        # ------- serial recurrence, fully unrolled over time -----------------
        h = [jnp.zeros((1, H), jnp.float32) for _ in range(L)]
        c = [jnp.zeros((1, H), jnp.float32) for _ in range(L)]
        for t in range(T):
            # Recurrent contributions of layers > 0 only depend on previous-step
            # state: issue them now so they overlap layer-0's matmul + cell.
            rec = [jnp.dot(h[l].astype(jnp.bfloat16), whh_l[l - 1],
                           preferred_element_type=jnp.float32) + b_l[l - 1]
                   for l in range(1, L)]

            # Layer 0: input gates precomputed; only the bf16 recurrent matmul
            # and the cell remain on the loop-carried critical path.
            gates = g0_ref[pl.ds(t, 1), :] + jnp.dot(
                h[0].astype(jnp.bfloat16), whh0,
                preferred_element_type=jnp.float32)
            h[0], c[0] = lstm_cell(gates, c[0])
            inp = h[0]

            # Layers > 0: only inp @ Wih_l is on the chain (no concatenate).
            for l in range(1, L):
                gates = rec[l - 1] + jnp.dot(
                    inp.astype(jnp.bfloat16), wih_l[l - 1],
                    preferred_element_type=jnp.float32)
                h[l], c[l] = lstm_cell(gates, c[l])
                inp = h[l]
            htop_ref[pl.ds(t, 1), :] = inp          # off the critical path

        # ------- FC + softmax + store, batched over all time steps (f32) -----
        logits = jnp.dot(htop_ref[...], wfc,
                         preferred_element_type=jnp.float32) + bfc      # (T, C)
        logits = logits - jnp.max(logits, axis=-1, keepdims=True)
        e = jnp.exp(logits)
        out_ref[...] = e / jnp.sum(e, axis=-1, keepdims=True)

    return kernel


@functools.partial(
    jax.jit,
    static_argnames=("num_layers", "input_size", "hidden_size", "classes",
                     "voc_size"))
def comb_forward(tokens, emb_table, slab, *, num_layers, input_size,
                 hidden_size, classes, voc_size):
    """tokens: (T,) int.  emb_table: (voc_size+1, input_size).  slab: packed weights."""
    T = tokens.shape[0]
    offs = _slab_offsets(num_layers, input_size, hidden_size)
    # Clamp ids (silent-corruption guard) and present them as a (T,1) column so
    # the kernel builds the one-hot gather with a lane iota.
    ids = jnp.clip(tokens.astype(jnp.int32), 0, voc_size).reshape(T, 1)
    kernel = make_comb_kernel(num_layers, T, input_size, hidden_size, classes,
                              offs)
    return pl.pallas_call(
        kernel,
        out_shape=jax.ShapeDtypeStruct((T, classes), jnp.float32),
        in_specs=[pl.BlockSpec(memory_space=pltpu.MemorySpace.VMEM)] * 3,
        out_specs=pl.BlockSpec(memory_space=pltpu.MemorySpace.VMEM),
        scratch_shapes=[pltpu.VMEM((T, 4 * hidden_size), jnp.float32),  # G0
                        pltpu.VMEM((T, hidden_size), jnp.float32)],     # h_top
    )(ids, emb_table, slab)


def reference_forward(tokens, emb_table, wih, whh, bih, bhh, wfc, bfc,
                      num_layers, hidden_size):
    """Pure-JAX (f32) reference mirroring torch.nn.LSTM/Linear/Softmax."""
    H = hidden_size
    x = emb_table[tokens]                     # (T, input_size)
    T = x.shape[0]
    h = [jnp.zeros((H,), jnp.float32) for _ in range(num_layers)]
    c = [jnp.zeros((H,), jnp.float32) for _ in range(num_layers)]
    outs = []
    for t in range(T):
        inp = x[t]
        for l in range(num_layers):
            g = wih[l] @ inp + whh[l] @ h[l] + bih[l] + bhh[l]
            i_g = jax.nn.sigmoid(g[0:H]); f_g = jax.nn.sigmoid(g[H:2 * H])
            g_g = jnp.tanh(g[2 * H:3 * H]); o_g = jax.nn.sigmoid(g[3 * H:4 * H])
            c[l] = f_g * c[l] + i_g * g_g
            h[l] = o_g * jnp.tanh(c[l])
            inp = h[l]
        outs.append(jax.nn.softmax(wfc @ inp + bfc))
    return jnp.stack(outs)


if __name__ == "__main__":
    # Module hyper-parameters (small, consistent with the forward pass).
    input_size, hidden_size, num_layers = 16, 32, 2
    emb_size, voc_size, classes = 16, 50, 8   # emb_size unused in forward()
    T = 8                                     # sequence length

    key = jax.random.PRNGKey(0)
    keys = jax.random.split(key, 3 + 4 * num_layers + 2)
    ki = iter(keys)
    scale = 1.0 / np.sqrt(hidden_size)
    U = lambda k, shape: jax.random.uniform(k, shape, jnp.float32, -scale, scale)

    tokens = jax.random.randint(next(ki), (T,), 0, voc_size + 1, dtype=jnp.int32)
    emb_table = jax.random.normal(next(ki), (voc_size + 1, input_size),
                                  dtype=jnp.float32) * 0.1

    wih, whh, bih, bhh = [], [], [], []
    for l in range(num_layers):
        in_l = input_size if l == 0 else hidden_size
        wih.append(U(next(ki), (4 * hidden_size, in_l)))
        whh.append(U(next(ki), (4 * hidden_size, hidden_size)))
        bih.append(U(next(ki), (4 * hidden_size,)))
        bhh.append(U(next(ki), (4 * hidden_size,)))
    wfc = U(next(ki), (classes, hidden_size))
    bfc = U(next(ki), (classes,))

    slab = pack_comb_weights(wih, whh, bih, bhh, wfc, bfc,
                             num_layers, input_size, hidden_size, classes)

    out = comb_forward(tokens, emb_table, slab,
                       num_layers=num_layers, input_size=input_size,
                       hidden_size=hidden_size, classes=classes,
                       voc_size=voc_size)
    out = jax.block_until_ready(out)

    ref = reference_forward(tokens, emb_table, wih, whh, bih, bhh, wfc, bfc,
                            num_layers, hidden_size)
    # bf16 recurrent-matmul operands (f32 accumulation) -> 1e-2 parity.
    np.testing.assert_allclose(np.asarray(out), np.asarray(ref),
                               rtol=1e-2, atol=1e-2)
    assert out.shape == (T, classes)
    print("KERNEL_OK")
</pallas_src>

<mosaic_0001>
module attributes {stable_mosaic.version = 11 : i64} {
  func.func @kernel(%arg0: memref<8x1xi32, #tpu.memory_space<vmem>>, %arg1: memref<51x16xf32, #tpu.memory_space<vmem>>, %arg2: memref<168x128xf32, #tpu.memory_space<vmem>>, %arg3: memref<8x8xf32, #tpu.memory_space<vmem>>, %arg4: memref<8x128xf32, #tpu.memory_space<vmem>>, %arg5: memref<8x32xf32, #tpu.memory_space<vmem>>) attributes {dimension_semantics = [], scalar_prefetch = 0 : i64, scratch_operands = 2 : i64, tpu.core_type = #tpu.core_type<tc>} {
    %c0 = arith.constant 0 : index
    %c0_0 = arith.constant 0 : index
    %0 = vector.load %arg2[%c0, %c0_0] : memref<168x128xf32, #tpu.memory_space<vmem>>, vector<16x128xf32>
    %c16 = arith.constant 16 : index
    %c0_1 = arith.constant 0 : index
    %1 = vector.load %arg2[%c16, %c0_1] : memref<168x128xf32, #tpu.memory_space<vmem>>, vector<32x128xf32>
    %2 = arith.truncf %1 : vector<32x128xf32> to vector<32x128xbf16>
    %c48 = arith.constant 48 : index
    %c0_2 = arith.constant 0 : index
    %3 = vector.load %arg2[%c48, %c0_2] : memref<168x128xf32, #tpu.memory_space<vmem>>, vector<1x128xf32>
    %c56 = arith.constant 56 : index
    %c0_3 = arith.constant 0 : index
    %4 = vector.load %arg2[%c56, %c0_3] : memref<168x128xf32, #tpu.memory_space<vmem>>, vector<32x128xf32>
    %5 = arith.truncf %4 : vector<32x128xf32> to vector<32x128xbf16>
    %c88 = arith.constant 88 : index
    %c0_4 = arith.constant 0 : index
    %6 = vector.load %arg2[%c88, %c0_4] : memref<168x128xf32, #tpu.memory_space<vmem>>, vector<32x128xf32>
    %7 = arith.truncf %6 : vector<32x128xf32> to vector<32x128xbf16>
    %c120 = arith.constant 120 : index
    %c0_5 = arith.constant 0 : index
    %8 = vector.load %arg2[%c120, %c0_5] : memref<168x128xf32, #tpu.memory_space<vmem>>, vector<1x128xf32>
    %c128 = arith.constant 128 : index
    %c0_6 = arith.constant 0 : index
    %9 = vector.load %arg2[%c128, %c0_6] : memref<168x128xf32, #tpu.memory_space<vmem>>, vector<32x8xf32>
    %c160 = arith.constant 160 : index
    %c0_7 = arith.constant 0 : index
    %10 = vector.load %arg2[%c160, %c0_7] : memref<168x128xf32, #tpu.memory_space<vmem>>, vector<1x8xf32>
    %c0_8 = arith.constant 0 : index
    %c0_9 = arith.constant 0 : index
    %11 = vector.load %arg0[%c0_8, %c0_9] : memref<8x1xi32, #tpu.memory_space<vmem>>, vector<8x1xi32>
    %12 = tpu.iota {dimensions = array<i32: 1>} : vector<8x51xi32>
    %13 = vector.broadcast %11 : vector<8x1xi32> to vector<8x51xi32>
    %14 = arith.cmpi eq, %12, %13 : vector<8x51xi32>
    %15 = arith.extui %14 : vector<8x51xi1> to vector<8x51xi32>
    %16 = arith.sitofp %15 : vector<8x51xi32> to vector<8x51xf32>
    %c0_10 = arith.constant 0 : index
    %c0_11 = arith.constant 0 : index
    %17 = vector.load %arg1[%c0_10, %c0_11] : memref<51x16xf32, #tpu.memory_space<vmem>>, vector<51x16xf32>
    %cst = arith.constant dense<0.000000e+00> : vector<8x16xf32>
    %18 = tpu.matmul %16, %17, %cst {dimension_numbers = #tpu.dot_dimension_numbers<[1], [0], [0], [1], [0, 0, 1, 1], [], []>} : vector<8x51xf32>, vector<51x16xf32>, vector<8x16xf32> -> vector<8x16xf32>
    %cst_12 = arith.constant dense<0.000000e+00> : vector<8x128xf32>
    %19 = tpu.matmul %18, %0, %cst_12 {dimension_numbers = #tpu.dot_dimension_numbers<[1], [0], [0], [1], [0, 0, 1, 1], [], []>} : vector<8x16xf32>, vector<16x128xf32>, vector<8x128xf32> -> vector<8x128xf32>
    %20 = vector.broadcast %3 : vector<1x128xf32> to vector<8x128xf32>
    %21 = arith.addf %19, %20 : vector<8x128xf32>
    %c0_13 = arith.constant 0 : index
    %c0_14 = arith.constant 0 : index
    %22 = vector.load %arg4[%c0_13, %c0_14] : memref<8x128xf32, #tpu.memory_space<vmem>>, vector<8x128xf32>
    tpu.vector_store %arg4[%c0_13, %c0_14], %21 {strides = array<i32>} : memref<8x128xf32, #tpu.memory_space<vmem>>, vector<8x128xf32>,
    %cst_15 = arith.constant 0.000000e+00 : f32
    %23 = vector.broadcast %cst_15 : f32 to vector<1x32xf32>
    %cst_16 = arith.constant 0.000000e+00 : f32
    %24 = vector.broadcast %cst_16 : f32 to vector<1x32xf32>
    %cst_17 = arith.constant 0.000000e+00 : f32
    %25 = vector.broadcast %cst_17 : f32 to vector<1x32xf32>
    %cst_18 = arith.constant 0.000000e+00 : f32
    %26 = vector.broadcast %cst_18 : f32 to vector<1x32xf32>
    %27 = arith.truncf %24 : vector<1x32xf32> to vector<1x32xbf16>
    %cst_19 = arith.constant dense<0.000000e+00> : vector<1x128xf32>
    %28 = tpu.matmul %27, %7, %cst_19 {dimension_numbers = #tpu.dot_dimension_numbers<[1], [0], [0], [1], [0, 0, 1, 1], [], []>} : vector<1x32xbf16>, vector<32x128xbf16>, vector<1x128xf32> -> vector<1x128xf32>
    %29 = arith.addf %28, %8 : vector<1x128xf32>
    %c0_20 = arith.constant 0 : index
    %c0_21 = arith.constant 0 : index
    %30 = vector.load %arg4[%c0_20, %c0_21] : memref<8x128xf32, #tpu.memory_space<vmem>>, vector<1x128xf32>
    %31 = arith.truncf %23 : vector<1x32xf32> to vector<1x32xbf16>
    %cst_22 = arith.constant dense<0.000000e+00> : vector<1x128xf32>
    %32 = tpu.matmul %31, %2, %cst_22 {dimension_numbers = #tpu.dot_dimension_numbers<[1], [0], [0], [1], [0, 0, 1, 1], [], []>} : vector<1x32xbf16>, vector<32x128xbf16>, vector<1x128xf32> -> vector<1x128xf32>
    %33 = arith.addf %30, %32 : vector<1x128xf32>
    %34 = arith.negf %33 : vector<1x128xf32>
    %35 = math.exp %34 : vector<1x128xf32>
    %cst_23 = arith.constant 1.000000e+00 : f32
    %36 = vector.broadcast %cst_23 : f32 to vector<1x128xf32>
    %37 = arith.addf %36, %35 : vector<1x128xf32>
    %38 = arith.divf %36, %37 : vector<1x128xf32>
    %39 = math.tanh %33 : vector<1x128xf32>
    %40 = vector.extract_strided_slice %38 {offsets = [0, 0], sizes = [1, 32], strides = [1, 1]} : vector<1x128xf32> to vector<1x32xf32>
    %41 = vector.extract_strided_slice %38 {offsets = [0, 32], sizes = [1, 32], strides = [1, 1]} : vector<1x128xf32> to vector<1x32xf32>
    %42 = vector.extract_strided_slice %39 {offsets = [0, 64], sizes = [1, 32], strides = [1, 1]} : vector<1x128xf32> to vector<1x32xf32>
    %43 = vector.extract_strided_slice %38 {offsets = [0, 96], sizes = [1, 32], strides = [1, 1]} : vector<1x128xf32> to vector<1x32xf32>
    %44 = arith.mulf %41, %25 : vector<1x32xf32>
    %45 = arith.mulf %40, %42 : vector<1x32xf32>
    %46 = arith.addf %44, %45 : vector<1x32xf32>
    %47 = math.tanh %46 : vector<1x32xf32>
    %48 = arith.mulf %43, %47 : vector<1x32xf32>
    %49 = arith.truncf %48 : vector<1x32xf32> to vector<1x32xbf16>
    %cst_24 = arith.constant dense<0.000000e+00> : vector<1x128xf32>
    %50 = tpu.matmul %49, %5, %cst_24 {dimension_numbers = #tpu.dot_dimension_numbers<[1], [0], [0], [1], [0, 0, 1, 1], [], []>} : vector<1x32xbf16>, vector<32x128xbf16>, vector<1x128xf32> -> vector<1x128xf32>
    %51 = arith.addf %29, %50 : vector<1x128xf32>
    %52 = arith.negf %51 : vector<1x128xf32>
    %53 = math.exp %52 : vector<1x128xf32>
    %cst_25 = arith.constant 1.000000e+00 : f32
    %54 = vector.broadcast %cst_25 : f32 to vector<1x128xf32>
    %55 = arith.addf %54, %53 : vector<1x128xf32>
    %56 = arith.divf %54, %55 : vector<1x128xf32>
    %57 = math.tanh %51 : vector<1x128xf32>
    %58 = vector.extract_strided_slice %56 {offsets = [0, 0], sizes = [1, 32], strides = [1, 1]} : vector<1x128xf32> to vector<1x32xf32>
    %59 = vector.extract_strided_slice %56 {offsets = [0, 32], sizes = [1, 32], strides = [1, 1]} : vector<1x128xf32> to vector<1x32xf32>
    %60 = vector.extract_strided_slice %57 {offsets = [0, 64], sizes = [1, 32], strides = [1, 1]} : vector<1x128xf32> to vector<1x32xf32>
    %61 = vector.extract_strided_slice %56 {offsets = [0, 96], sizes = [1, 32], strides = [1, 1]} : vector<1x128xf32> to vector<1x32xf32>
    %62 = arith.mulf %59, %26 : vector<1x32xf32>
    %63 = arith.mulf %58, %60 : vector<1x32xf32>
    %64 = arith.addf %62, %63 : vector<1x32xf32>
    %65 = math.tanh %64 : vector<1x32xf32>
    %66 = arith.mulf %61, %65 : vector<1x32xf32>
    %c0_26 = arith.constant 0 : index
    %c0_27 = arith.constant 0 : index
    %67 = vector.load %arg5[%c0_26, %c0_27] : memref<8x32xf32, #tpu.memory_space<vmem>>, vector<1x32xf32>
    tpu.vector_store %arg5[%c0_26, %c0_27], %66 {strides = array<i32>} : memref<8x32xf32, #tpu.memory_space<vmem>>, vector<1x32xf32>,
    %68 = arith.truncf %66 : vector<1x32xf32> to vector<1x32xbf16>
    %cst_28 = arith.constant dense<0.000000e+00> : vector<1x128xf32>
    %69 = tpu.matmul %68, %7, %cst_28 {dimension_numbers = #tpu.dot_dimension_numbers<[1], [0], [0], [1], [0, 0, 1, 1], [], []>} : vector<1x32xbf16>, vector<32x128xbf16>, vector<1x128xf32> -> vector<1x128xf32>
    %70 = arith.addf %69, %8 : vector<1x128xf32>
    %c1 = arith.constant 1 : index
    %c0_29 = arith.constant 0 : index
    %71 = vector.load %arg4[%c1, %c0_29] : memref<8x128xf32, #tpu.memory_space<vmem>>, vector<1x128xf32>
    %72 = arith.truncf %48 : vector<1x32xf32> to vector<1x32xbf16>
    %cst_30 = arith.constant dense<0.000000e+00> : vector<1x128xf32>
    %73 = tpu.matmul %72, %2, %cst_30 {dimension_numbers = #tpu.dot_dimension_numbers<[1], [0], [0], [1], [0, 0, 1, 1], [], []>} : vector<1x32xbf16>, vector<32x128xbf16>, vector<1x128xf32> -> vector<1x128xf32>
    %74 = arith.addf %71, %73 : vector<1x128xf32>
    %75 = arith.negf %74 : vector<1x128xf32>
    %76 = math.exp %75 : vector<1x128xf32>
    %cst_31 = arith.constant 1.000000e+00 : f32
    %77 = vector.broadcast %cst_31 : f32 to vector<1x128xf32>
    %78 = arith.addf %77, %76 : vector<1x128xf32>
    %79 = arith.divf %77, %78 : vector<1x128xf32>
    %80 = math.tanh %74 : vector<1x128xf32>
    %81 = vector.extract_strided_slice %79 {offsets = [0, 0], sizes = [1, 32], strides = [1, 1]} : vector<1x128xf32> to vector<1x32xf32>
    %82 = vector.extract_strided_slice %79 {offsets = [0, 32], sizes = [1, 32], strides = [1, 1]} : vector<1x128xf32> to vector<1x32xf32>
    %83 = vector.extract_strided_slice %80 {offsets = [0, 64], sizes = [1, 32], strides = [1, 1]} : vector<1x128xf32> to vector<1x32xf32>
    %84 = vector.extract_strided_slice %79 {offsets = [0, 96], sizes = [1, 32], strides = [1, 1]} : vector<1x128xf32> to vector<1x32xf32>
    %85 = arith.mulf %82, %46 : vector<1x32xf32>
    %86 = arith.mulf %81, %83 : vector<1x32xf32>
    %87 = arith.addf %85, %86 : vector<1x32xf32>
    %88 = math.tanh %87 : vector<1x32xf32>
    %89 = arith.mulf %84, %88 : vector<1x32xf32>
    %90 = arith.truncf %89 : vector<1x32xf32> to vector<1x32xbf16>
    %cst_32 = arith.constant dense<0.000000e+00> : vector<1x128xf32>
    %91 = tpu.matmul %90, %5, %cst_32 {dimension_numbers = #tpu.dot_dimension_numbers<[1], [0], [0], [1], [0, 0, 1, 1], [], []>} : vector<1x32xbf16>, vector<32x128xbf16>, vector<1x128xf32> -> vector<1x128xf32>
    %92 = arith.addf %70, %91 : vector<1x128xf32>
    %93 = arith.negf %92 : vector<1x128xf32>
    %94 = math.exp %93 : vector<1x128xf32>
    %cst_33 = arith.constant 1.000000e+00 : f32
    %95 = vector.broadcast %cst_33 : f32 to vector<1x128xf32>
    %96 = arith.addf %95, %94 : vector<1x128xf32>
    %97 = arith.divf %95, %96 : vector<1x128xf32>
    %98 = math.tanh %92 : vector<1x128xf32>
    %99 = vector.extract_strided_slice %97 {offsets = [0, 0], sizes = [1, 32], strides = [1, 1]} : vector<1x128xf32> to vector<1x32xf32>
    %100 = vector.extract_strided_slice %97 {offsets = [0, 32], sizes = [1, 32], strides = [1, 1]} : vector<1x128xf32> to vector<1x32xf32>
    %101 = vector.extract_strided_slice %98 {offsets = [0, 64], sizes = [1, 32], strides = [1, 1]} : vector<1x128xf32> to vector<1x32xf32>
    %102 = vector.extract_strided_slice %97 {offsets = [0, 96], sizes = [1, 32], strides = [1, 1]} : vector<1x128xf32> to vector<1x32xf32>
    %103 = arith.mulf %100, %64 : vector<1x32xf32>
    %104 = arith.mulf %99, %101 : vector<1x32xf32>
    %105 = arith.addf %103, %104 : vector<1x32xf32>
    %106 = math.tanh %105 : vector<1x32xf32>
    %107 = arith.mulf %102, %106 : vector<1x32xf32>
    %c1_34 = arith.constant 1 : index
    %c0_35 = arith.constant 0 : index
    %108 = vector.load %arg5[%c1_34, %c0_35] : memref<8x32xf32, #tpu.memory_space<vmem>>, vector<1x32xf32>
    tpu.vector_store %arg5[%c1_34, %c0_35], %107 {strides = array<i32>} : memref<8x32xf32, #tpu.memory_space<vmem>>, vector<1x32xf32>,
    %109 = arith.truncf %107 : vector<1x32xf32> to vector<1x32xbf16>
    %cst_36 = arith.constant dense<0.000000e+00> : vector<1x128xf32>
    %110 = tpu.matmul %109, %7, %cst_36 {dimension_numbers = #tpu.dot_dimension_numbers<[1], [0], [0], [1], [0, 0, 1, 1], [], []>} : vector<1x32xbf16>, vector<32x128xbf16>, vector<1x128xf32> -> vector<1x128xf32>
    %111 = arith.addf %110, %8 : vector<1x128xf32>
    %c2 = arith.constant 2 : index
    %c0_37 = arith.constant 0 : index
    %112 = vector.load %arg4[%c2, %c0_37] : memref<8x128xf32, #tpu.memory_space<vmem>>, vector<1x128xf32>
    %113 = arith.truncf %89 : vector<1x32xf32> to vector<1x32xbf16>
    %cst_38 = arith.constant dense<0.000000e+00> : vector<1x128xf32>
    %114 = tpu.matmul %113, %2, %cst_38 {dimension_numbers = #tpu.dot_dimension_numbers<[1], [0], [0], [1], [0, 0, 1, 1], [], []>} : vector<1x32xbf16>, vector<32x128xbf16>, vector<1x128xf32> -> vector<1x128xf32>
    %115 = arith.addf %112, %114 : vector<1x128xf32>
    %116 = arith.negf %115 : vector<1x128xf32>
    %117 = math.exp %116 : vector<1x128xf32>
    %cst_39 = arith.constant 1.000000e+00 : f32
    %118 = vector.broadcast %cst_39 : f32 to vector<1x128xf32>
    %119 = arith.addf %118, %117 : vector<1x128xf32>
    %120 = arith.divf %118, %119 : vector<1x128xf32>
    %121 = math.tanh %115 : vector<1x128xf32>
    %122 = vector.extract_strided_slice %120 {offsets = [0, 0], sizes = [1, 32], strides = [1, 1]} : vector<1x128xf32> to vector<1x32xf32>
    %123 = vector.extract_strided_slice %120 {offsets = [0, 32], sizes = [1, 32], strides = [1, 1]} : vector<1x128xf32> to vector<1x32xf32>
    %124 = vector.extract_strided_slice %121 {offsets = [0, 64], sizes = [1, 32], strides = [1, 1]} : vector<1x128xf32> to vector<1x32xf32>
    %125 = vector.extract_strided_slice %120 {offsets = [0, 96], sizes = [1, 32], strides = [1, 1]} : vector<1x128xf32> to vector<1x32xf32>
    %126 = arith.mulf %123, %87 : vector<1x32xf32>
    %127 = arith.mulf %122, %124 : vector<1x32xf32>
    %128 = arith.addf %126, %127 : vector<1x32xf32>
    %129 = math.tanh %128 : vector<1x32xf32>
    %130 = arith.mulf %125, %129 : vector<1x32xf32>
    %131 = arith.truncf %130 : vector<1x32xf32> to vector<1x32xbf16>
    %cst_40 = arith.constant dense<0.000000e+00> : vector<1x128xf32>
    %132 = tpu.matmul %131, %5, %cst_40 {dimension_numbers = #tpu.dot_dimension_numbers<[1], [0], [0], [1], [0, 0, 1, 1], [], []>} : vector<1x32xbf16>, vector<32x128xbf16>, vector<1x128xf32> -> vector<1x128xf32>
    %133 = arith.addf %111, %132 : vector<1x128xf32>
    %134 = arith.negf %133 : vector<1x128xf32>
    %135 = math.exp %134 : vector<1x128xf32>
    %cst_41 = arith.constant 1.000000e+00 : f32
    %136 = vector.broadcast %cst_41 : f32 to vector<1x128xf32>
    %137 = arith.addf %136, %135 : vector<1x128xf32>
    %138 = arith.divf %136, %137 : vector<1x128xf32>
    %139 = math.tanh %133 : vector<1x128xf32>
    %140 = vector.extract_strided_slice %138 {offsets = [0, 0], sizes = [1, 32], strides = [1, 1]} : vector<1x128xf32> to vector<1x32xf32>
    %141 = vector.extract_strided_slice %138 {offsets = [0, 32], sizes = [1, 32], strides = [1, 1]} : vector<1x128xf32> to vector<1x32xf32>
    %142 = vector.extract_strided_slice %139 {offsets = [0, 64], sizes = [1, 32], strides = [1, 1]} : vector<1x128xf32> to vector<1x32xf32>
    %143 = vector.extract_strided_slice %138 {offsets = [0, 96], sizes = [1, 32], strides = [1, 1]} : vector<1x128xf32> to vector<1x32xf32>
    %144 = arith.mulf %141, %105 : vector<1x32xf32>
    %145 = arith.mulf %140, %142 : vector<1x32xf32>
    %146 = arith.addf %144, %145 : vector<1x32xf32>
    %147 = math.tanh %146 : vector<1x32xf32>
    %148 = arith.mulf %143, %147 : vector<1x32xf32>
    %c2_42 = arith.constant 2 : index
    %c0_43 = arith.constant 0 : index
    %149 = vector.load %arg5[%c2_42, %c0_43] : memref<8x32xf32, #tpu.memory_space<vmem>>, vector<1x32xf32>
    tpu.vector_store %arg5[%c2_42, %c0_43], %148 {strides = array<i32>} : memref<8x32xf32, #tpu.memory_space<vmem>>, vector<1x32xf32>,
    %150 = arith.truncf %148 : vector<1x32xf32> to vector<1x32xbf16>
    %cst_44 = arith.constant dense<0.000000e+00> : vector<1x128xf32>
    %151 = tpu.matmul %150, %7, %cst_44 {dimension_numbers = #tpu.dot_dimension_numbers<[1], [0], [0], [1], [0, 0, 1, 1], [], []>} : vector<1x32xbf16>, vector<32x128xbf16>, vector<1x128xf32> -> vector<1x128xf32>
    %152 = arith.addf %151, %8 : vector<1x128xf32>
    %c3 = arith.constant 3 : index
    %c0_45 = arith.constant 0 : index
    %153 = vector.load %arg4[%c3, %c0_45] : memref<8x128xf32, #tpu.memory_space<vmem>>, vector<1x128xf32>
    %154 = arith.truncf %130 : vector<1x32xf32> to vector<1x32xbf16>
    %cst_46 = arith.constant dense<0.000000e+00> : vector<1x128xf32>
    %155 = tpu.matmul %154, %2, %cst_46 {dimension_numbers = #tpu.dot_dimension_numbers<[1], [0], [0], [1], [0, 0, 1, 1], [], []>} : vector<1x32xbf16>, vector<32x128xbf16>, vector<1x128xf32> -> vector<1x128xf32>
    %156 = arith.addf %153, %155 : vector<1x128xf32>
    %157 = arith.negf %156 : vector<1x128xf32>
    %158 = math.exp %157 : vector<1x128xf32>
    %cst_47 = arith.constant 1.000000e+00 : f32
    %159 = vector.broadcast %cst_47 : f32 to vector<1x128xf32>
    %160 = arith.addf %159, %158 : vector<1x128xf32>
    %161 = arith.divf %159, %160 : vector<1x128xf32>
    %162 = math.tanh %156 : vector<1x128xf32>
    %163 = vector.extract_strided_slice %161 {offsets = [0, 0], sizes = [1, 32], strides = [1, 1]} : vector<1x128xf32> to vector<1x32xf32>
    %164 = vector.extract_strided_slice %161 {offsets = [0, 32], sizes = [1, 32], strides = [1, 1]} : vector<1x128xf32> to vector<1x32xf32>
    %165 = vector.extract_strided_slice %162 {offsets = [0, 64], sizes = [1, 32], strides = [1, 1]} : vector<1x128xf32> to vector<1x32xf32>
    %166 = vector.extract_strided_slice %161 {offsets = [0, 96], sizes = [1, 32], strides = [1, 1]} : vector<1x128xf32> to vector<1x32xf32>
    %167 = arith.mulf %164, %128 : vector<1x32xf32>
    %168 = arith.mulf %163, %165 : vector<1x32xf32>
    %169 = arith.addf %167, %168 : vector<1x32xf32>
    %170 = math.tanh %169 : vector<1x32xf32>
    %171 = arith.mulf %166, %170 : vector<1x32xf32>
    %172 = arith.truncf %171 : vector<1x32xf32> to vector<1x32xbf16>
    %cst_48 = arith.constant dense<0.000000e+00> : vector<1x128xf32>
    %173 = tpu.matmul %172, %5, %cst_48 {dimension_numbers = #tpu.dot_dimension_numbers<[1], [0], [0], [1], [0, 0, 1, 1], [], []>} : vector<1x32xbf16>, vector<32x128xbf16>, vector<1x128xf32> -> vector<1x128xf32>
    %174 = arith.addf %152, %173 : vector<1x128xf32>
    %175 = arith.negf %174 : vector<1x128xf32>
    %176 = math.exp %175 : vector<1x128xf32>
    %cst_49 = arith.constant 1.000000e+00 : f32
    %177 = vector.broadcast %cst_49 : f32 to vector<1x128xf32>
    %178 = arith.addf %177, %176 : vector<1x128xf32>
    %179 = arith.divf %177, %178 : vector<1x128xf32>
    %180 = math.tanh %174 : vector<1x128xf32>
    %181 = vector.extract_strided_slice %179 {offsets = [0, 0], sizes = [1, 32], strides = [1, 1]} : vector<1x128xf32> to vector<1x32xf32>
    %182 = vector.extract_strided_slice %179 {offsets = [0, 32], sizes = [1, 32], strides = [1, 1]} : vector<1x128xf32> to vector<1x32xf32>
    %183 = vector.extract_strided_slice %180 {offsets = [0, 64], sizes = [1, 32], strides = [1, 1]} : vector<1x128xf32> to vector<1x32xf32>
    %184 = vector.extract_strided_slice %179 {offsets = [0, 96], sizes = [1, 32], strides = [1, 1]} : vector<1x128xf32> to vector<1x32xf32>
    %185 = arith.mulf %182, %146 : vector<1x32xf32>
    %186 = arith.mulf %181, %183 : vector<1x32xf32>
    %187 = arith.addf %185, %186 : vector<1x32xf32>
    %188 = math.tanh %187 : vector<1x32xf32>
    %189 = arith.mulf %184, %188 : vector<1x32xf32>
    %c3_50 = arith.constant 3 : index
    %c0_51 = arith.constant 0 : index
    %190 = vector.load %arg5[%c3_50, %c0_51] : memref<8x32xf32, #tpu.memory_space<vmem>>, vector<1x32xf32>
    tpu.vector_store %arg5[%c3_50, %c0_51], %189 {strides = array<i32>} : memref<8x32xf32, #tpu.memory_space<vmem>>, vector<1x32xf32>,
    %191 = arith.truncf %189 : vector<1x32xf32> to vector<1x32xbf16>
    %cst_52 = arith.constant dense<0.000000e+00> : vector<1x128xf32>
    %192 = tpu.matmul %191, %7, %cst_52 {dimension_numbers = #tpu.dot_dimension_numbers<[1], [0], [0], [1], [0, 0, 1, 1], [], []>} : vector<1x32xbf16>, vector<32x128xbf16>, vector<1x128xf32> -> vector<1x128xf32>
    %193 = arith.addf %192, %8 : vector<1x128xf32>
    %c4 = arith.constant 4 : index
    %c0_53 = arith.constant 0 : index
    %194 = vector.load %arg4[%c4, %c0_53] : memref<8x128xf32, #tpu.memory_space<vmem>>, vector<1x128xf32>
    %195 = arith.truncf %171 : vector<1x32xf32> to vector<1x32xbf16>
    %cst_54 = arith.constant dense<0.000000e+00> : vector<1x128xf32>
    %196 = tpu.matmul %195, %2, %cst_54 {dimension_numbers = #tpu.dot_dimension_numbers<[1], [0], [0], [1], [0, 0, 1, 1], [], []>} : vector<1x32xbf16>, vector<32x128xbf16>, vector<1x128xf32> -> vector<1x128xf32>
    %197 = arith.addf %194, %196 : vector<1x128xf32>
    %198 = arith.negf %197 : vector<1x128xf32>
    %199 = math.exp %198 : vector<1x128xf32>
    %cst_55 = arith.constant 1.000000e+00 : f32
    %200 = vector.broadcast %cst_55 : f32 to vector<1x128xf32>
    %201 = arith.addf %200, %199 : vector<1x128xf32>
    %202 = arith.divf %200, %201 : vector<1x128xf32>
    %203 = math.tanh %197 : vector<1x128xf32>
    %204 = vector.extract_strided_slice %202 {offsets = [0, 0], sizes = [1, 32], strides = [1, 1]} : vector<1x128xf32> to vector<1x32xf32>
    %205 = vector.extract_strided_slice %202 {offsets = [0, 32], sizes = [1, 32], strides = [1, 1]} : vector<1x128xf32> to vector<1x32xf32>
    %206 = vector.extract_strided_slice %203 {offsets = [0, 64], sizes = [1, 32], strides = [1, 1]} : vector<1x128xf32> to vector<1x32xf32>
    %207 = vector.extract_strided_slice %202 {offsets = [0, 96], sizes = [1, 32], strides = [1, 1]} : vector<1x128xf32> to vector<1x32xf32>
    %208 = arith.mulf %205, %169 : vector<1x32xf32>
    %209 = arith.mulf %204, %206 : vector<1x32xf32>
    %210 = arith.addf %208, %209 : vector<1x32xf32>
    %211 = math.tanh %210 : vector<1x32xf32>
    %212 = arith.mulf %207, %211 : vector<1x32xf32>
    %213 = arith.truncf %212 : vector<1x32xf32> to vector<1x32xbf16>
    %cst_56 = arith.constant dense<0.000000e+00> : vector<1x128xf32>
    %214 = tpu.matmul %213, %5, %cst_56 {dimension_numbers = #tpu.dot_dimension_numbers<[1], [0], [0], [1], [0, 0, 1, 1], [], []>} : vector<1x32xbf16>, vector<32x128xbf16>, vector<1x128xf32> -> vector<1x128xf32>
    %215 = arith.addf %193, %214 : vector<1x128xf32>
    %216 = arith.negf %215 : vector<1x128xf32>
    %217 = math.exp %216 : vector<1x128xf32>
    %cst_57 = arith.constant 1.000000e+00 : f32
    %218 = vector.broadcast %cst_57 : f32 to vector<1x128xf32>
    %219 = arith.addf %218, %217 : vector<1x128xf32>
    %220 = arith.divf %218, %219 : vector<1x128xf32>
    %221 = math.tanh %215 : vector<1x128xf32>
    %222 = vector.extract_strided_slice %220 {offsets = [0, 0], sizes = [1, 32], strides = [1, 1]} : vector<1x128xf32> to vector<1x32xf32>
    %223 = vector.extract_strided_slice %220 {offsets = [0, 32], sizes = [1, 32], strides = [1, 1]} : vector<1x128xf32> to vector<1x32xf32>
    %224 = vector.extract_strided_slice %221 {offsets = [0, 64], sizes = [1, 32], strides = [1, 1]} : vector<1x128xf32> to vector<1x32xf32>
    %225 = vector.extract_strided_slice %220 {offsets = [0, 96], sizes = [1, 32], strides = [1, 1]} : vector<1x128xf32> to vector<1x32xf32>
    %226 = arith.mulf %223, %187 : vector<1x32xf32>
    %227 = arith.mulf %222, %224 : vector<1x32xf32>
    %228 = arith.addf %226, %227 : vector<1x32xf32>
    %229 = math.tanh %228 : vector<1x32xf32>
    %230 = arith.mulf %225, %229 : vector<1x32xf32>
    %c4_58 = arith.constant 4 : index
    %c0_59 = arith.constant 0 : index
    %231 = vector.load %arg5[%c4_58, %c0_59] : memref<8x32xf32, #tpu.memory_space<vmem>>, vector<1x32xf32>
    tpu.vector_store %arg5[%c4_58, %c0_59], %230 {strides = array<i32>} : memref<8x32xf32, #tpu.memory_space<vmem>>, vector<1x32xf32>,
    %232 = arith.truncf %230 : vector<1x32xf32> to vector<1x32xbf16>
    %cst_60 = arith.constant dense<0.000000e+00> : vector<1x128xf32>
    %233 = tpu.matmul %232, %7, %cst_60 {dimension_numbers = #tpu.dot_dimension_numbers<[1], [0], [0], [1], [0, 0, 1, 1], [], []>} : vector<1x32xbf16>, vector<32x128xbf16>, vector<1x128xf32> -> vector<1x128xf32>
    %234 = arith.addf %233, %8 : vector<1x128xf32>
    %c5 = arith.constant 5 : index
    %c0_61 = arith.constant 0 : index
    %235 = vector.load %arg4[%c5, %c0_61] : memref<8x128xf32, #tpu.memory_space<vmem>>, vector<1x128xf32>
    %236 = arith.truncf %212 : vector<1x32xf32> to vector<1x32xbf16>
    %cst_62 = arith.constant dense<0.000000e+00> : vector<1x128xf32>
    %237 = tpu.matmul %236, %2, %cst_62 {dimension_numbers = #tpu.dot_dimension_numbers<[1], [0], [0], [1], [0, 0, 1, 1], [], []>} : vector<1x32xbf16>, vector<32x128xbf16>, vector<1x128xf32> -> vector<1x128xf32>
    %238 = arith.addf %235, %237 : vector<1x128xf32>
    %239 = arith.negf %238 : vector<1x128xf32>
    %240 = math.exp %239 : vector<1x128xf32>
    %cst_63 = arith.constant 1.000000e+00 : f32
    %241 = vector.broadcast %cst_63 : f32 to vector<1x128xf32>
    %242 = arith.addf %241, %240 : vector<1x128xf32>
    %243 = arith.divf %241, %242 : vector<1x128xf32>
    %244 = math.tanh %238 : vector<1x128xf32>
    %245 = vector.extract_strided_slice %243 {offsets = [0, 0], sizes = [1, 32], strides = [1, 1]} : vector<1x128xf32> to vector<1x32xf32>
    %246 = vector.extract_strided_slice %243 {offsets = [0, 32], sizes = [1, 32], strides = [1, 1]} : vector<1x128xf32> to vector<1x32xf32>
    %247 = vector.extract_strided_slice %244 {offsets = [0, 64], sizes = [1, 32], strides = [1, 1]} : vector<1x128xf32> to vector<1x32xf32>
    %248 = vector.extract_strided_slice %243 {offsets = [0, 96], sizes = [1, 32], strides = [1, 1]} : vector<1x128xf32> to vector<1x32xf32>
    %249 = arith.mulf %246, %210 : vector<1x32xf32>
    %250 = arith.mulf %245, %247 : vector<1x32xf32>
    %251 = arith.addf %249, %250 : vector<1x32xf32>
    %252 = math.tanh %251 : vector<1x32xf32>
    %253 = arith.mulf %248, %252 : vector<1x32xf32>
    %254 = arith.truncf %253 : vector<1x32xf32> to vector<1x32xbf16>
    %cst_64 = arith.constant dense<0.000000e+00> : vector<1x128xf32>
    %255 = tpu.matmul %254, %5, %cst_64 {dimension_numbers = #tpu.dot_dimension_numbers<[1], [0], [0], [1], [0, 0, 1, 1], [], []>} : vector<1x32xbf16>, vector<32x128xbf16>, vector<1x128xf32> -> vector<1x128xf32>
    %256 = arith.addf %234, %255 : vector<1x128xf32>
    %257 = arith.negf %256 : vector<1x128xf32>
    %258 = math.exp %257 : vector<1x128xf32>
    %cst_65 = arith.constant 1.000000e+00 : f32
    %259 = vector.broadcast %cst_65 : f32 to vector<1x128xf32>
    %260 = arith.addf %259, %258 : vector<1x128xf32>
    %261 = arith.divf %259, %260 : vector<1x128xf32>
    %262 = math.tanh %256 : vector<1x128xf32>
    %263 = vector.extract_strided_slice %261 {offsets = [0, 0], sizes = [1, 32], strides = [1, 1]} : vector<1x128xf32> to vector<1x32xf32>
    %264 = vector.extract_strided_slice %261 {offsets = [0, 32], sizes = [1, 32], strides = [1, 1]} : vector<1x128xf32> to vector<1x32xf32>
    %265 = vector.extract_strided_slice %262 {offsets = [0, 64], sizes = [1, 32], strides = [1, 1]} : vector<1x128xf32> to vector<1x32xf32>
    %266 = vector.extract_strided_slice %261 {offsets = [0, 96], sizes = [1, 32], strides = [1, 1]} : vector<1x128xf32> to vector<1x32xf32>
    %267 = arith.mulf %264, %228 : vector<1x32xf32>
    %268 = arith.mulf %263, %265 : vector<1x32xf32>
    %269 = arith.addf %267, %268 : vector<1x32xf32>
    %270 = math.tanh %269 : vector<1x32xf32>
    %271 = arith.mulf %266, %270 : vector<1x32xf32>
    %c5_66 = arith.constant 5 : index
    %c0_67 = arith.constant 0 : index
    %272 = vector.load %arg5[%c5_66, %c0_67] : memref<8x32xf32, #tpu.memory_space<vmem>>, vector<1x32xf32>
    tpu.vector_store %arg5[%c5_66, %c0_67], %271 {strides = array<i32>} : memref<8x32xf32, #tpu.memory_space<vmem>>, vector<1x32xf32>,
    %273 = arith.truncf %271 : vector<1x32xf32> to vector<1x32xbf16>
    %cst_68 = arith.constant dense<0.000000e+00> : vector<1x128xf32>
    %274 = tpu.matmul %273, %7, %cst_68 {dimension_numbers = #tpu.dot_dimension_numbers<[1], [0], [0], [1], [0, 0, 1, 1], [], []>} : vector<1x32xbf16>, vector<32x128xbf16>, vector<1x128xf32> -> vector<1x128xf32>
    %275 = arith.addf %274, %8 : vector<1x128xf32>
    %c6 = arith.constant 6 : index
    %c0_69 = arith.constant 0 : index
    %276 = vector.load %arg4[%c6, %c0_69] : memref<8x128xf32, #tpu.memory_space<vmem>>, vector<1x128xf32>
    %277 = arith.truncf %253 : vector<1x32xf32> to vector<1x32xbf16>
    %cst_70 = arith.constant dense<0.000000e+00> : vector<1x128xf32>
    %278 = tpu.matmul %277, %2, %cst_70 {dimension_numbers = #tpu.dot_dimension_numbers<[1], [0], [0], [1], [0, 0, 1, 1], [], []>} : vector<1x32xbf16>, vector<32x128xbf16>, vector<1x128xf32> -> vector<1x128xf32>
    %279 = arith.addf %276, %278 : vector<1x128xf32>
    %280 = arith.negf %279 : vector<1x128xf32>
    %281 = math.exp %280 : vector<1x128xf32>
    %cst_71 = arith.constant 1.000000e+00 : f32
    %282 = vector.broadcast %cst_71 : f32 to vector<1x128xf32>
    %283 = arith.addf %282, %281 : vector<1x128xf32>
    %284 = arith.divf %282, %283 : vector<1x128xf32>
    %285 = math.tanh %279 : vector<1x128xf32>
    %286 = vector.extract_strided_slice %284 {offsets = [0, 0], sizes = [1, 32], strides = [1, 1]} : vector<1x128xf32> to vector<1x32xf32>
    %287 = vector.extract_strided_slice %284 {offsets = [0, 32], sizes = [1, 32], strides = [1, 1]} : vector<1x128xf32> to vector<1x32xf32>
    %288 = vector.extract_strided_slice %285 {offsets = [0, 64], sizes = [1, 32], strides = [1, 1]} : vector<1x128xf32> to vector<1x32xf32>
    %289 = vector.extract_strided_slice %284 {offsets = [0, 96], sizes = [1, 32], strides = [1, 1]} : vector<1x128xf32> to vector<1x32xf32>
    %290 = arith.mulf %287, %251 : vector<1x32xf32>
    %291 = arith.mulf %286, %288 : vector<1x32xf32>
    %292 = arith.addf %290, %291 : vector<1x32xf32>
    %293 = math.tanh %292 : vector<1x32xf32>
    %294 = arith.mulf %289, %293 : vector<1x32xf32>
    %295 = arith.truncf %294 : vector<1x32xf32> to vector<1x32xbf16>
    %cst_72 = arith.constant dense<0.000000e+00> : vector<1x128xf32>
    %296 = tpu.matmul %295, %5, %cst_72 {dimension_numbers = #tpu.dot_dimension_numbers<[1], [0], [0], [1], [0, 0, 1, 1], [], []>} : vector<1x32xbf16>, vector<32x128xbf16>, vector<1x128xf32> -> vector<1x128xf32>
    %297 = arith.addf %275, %296 : vector<1x128xf32>
    %298 = arith.negf %297 : vector<1x128xf32>
    %299 = math.exp %298 : vector<1x128xf32>
    %cst_73 = arith.constant 1.000000e+00 : f32
    %300 = vector.broadcast %cst_73 : f32 to vector<1x128xf32>
    %301 = arith.addf %300, %299 : vector<1x128xf32>
    %302 = arith.divf %300, %301 : vector<1x128xf32>
    %303 = math.tanh %297 : vector<1x128xf32>
    %304 = vector.extract_strided_slice %302 {offsets = [0, 0], sizes = [1, 32], strides = [1, 1]} : vector<1x128xf32> to vector<1x32xf32>
    %305 = vector.extract_strided_slice %302 {offsets = [0, 32], sizes = [1, 32], strides = [1, 1]} : vector<1x128xf32> to vector<1x32xf32>
    %306 = vector.extract_strided_slice %303 {offsets = [0, 64], sizes = [1, 32], strides = [1, 1]} : vector<1x128xf32> to vector<1x32xf32>
    %307 = vector.extract_strided_slice %302 {offsets = [0, 96], sizes = [1, 32], strides = [1, 1]} : vector<1x128xf32> to vector<1x32xf32>
    %308 = arith.mulf %305, %269 : vector<1x32xf32>
    %309 = arith.mulf %304, %306 : vector<1x32xf32>
    %310 = arith.addf %308, %309 : vector<1x32xf32>
    %311 = math.tanh %310 : vector<1x32xf32>
    %312 = arith.mulf %307, %311 : vector<1x32xf32>
    %c6_74 = arith.constant 6 : index
    %c0_75 = arith.constant 0 : index
    %313 = vector.load %arg5[%c6_74, %c0_75] : memref<8x32xf32, #tpu.memory_space<vmem>>, vector<1x32xf32>
    tpu.vector_store %arg5[%c6_74, %c0_75], %312 {strides = array<i32>} : memref<8x32xf32, #tpu.memory_space<vmem>>, vector<1x32xf32>,
    %314 = arith.truncf %312 : vector<1x32xf32> to vector<1x32xbf16>
    %cst_76 = arith.constant dense<0.000000e+00> : vector<1x128xf32>
    %315 = tpu.matmul %314, %7, %cst_76 {dimension_numbers = #tpu.dot_dimension_numbers<[1], [0], [0], [1], [0, 0, 1, 1], [], []>} : vector<1x32xbf16>, vector<32x128xbf16>, vector<1x128xf32> -> vector<1x128xf32>
    %316 = arith.addf %315, %8 : vector<1x128xf32>
    %c7 = arith.constant 7 : index
    %c0_77 = arith.constant 0 : index
    %317 = vector.load %arg4[%c7, %c0_77] : memref<8x128xf32, #tpu.memory_space<vmem>>, vector<1x128xf32>
    %318 = arith.truncf %294 : vector<1x32xf32> to vector<1x32xbf16>
    %cst_78 = arith.constant dense<0.000000e+00> : vector<1x128xf32>
    %319 = tpu.matmul %318, %2, %cst_78 {dimension_numbers = #tpu.dot_dimension_numbers<[1], [0], [0], [1], [0, 0, 1, 1], [], []>} : vector<1x32xbf16>, vector<32x128xbf16>, vector<1x128xf32> -> vector<1x128xf32>
    %320 = arith.addf %317, %319 : vector<1x128xf32>
    %321 = arith.negf %320 : vector<1x128xf32>
    %322 = math.exp %321 : vector<1x128xf32>
    %cst_79 = arith.constant 1.000000e+00 : f32
    %323 = vector.broadcast %cst_79 : f32 to vector<1x128xf32>
    %324 = arith.addf %323, %322 : vector<1x128xf32>
    %325 = arith.divf %323, %324 : vector<1x128xf32>
    %326 = math.tanh %320 : vector<1x128xf32>
    %327 = vector.extract_strided_slice %325 {offsets = [0, 0], sizes = [1, 32], strides = [1, 1]} : vector<1x128xf32> to vector<1x32xf32>
    %328 = vector.extract_strided_slice %325 {offsets = [0, 32], sizes = [1, 32], strides = [1, 1]} : vector<1x128xf32> to vector<1x32xf32>
    %329 = vector.extract_strided_slice %326 {offsets = [0, 64], sizes = [1, 32], strides = [1, 1]} : vector<1x128xf32> to vector<1x32xf32>
    %330 = vector.extract_strided_slice %325 {offsets = [0, 96], sizes = [1, 32], strides = [1, 1]} : vector<1x128xf32> to vector<1x32xf32>
    %331 = arith.mulf %328, %292 : vector<1x32xf32>
    %332 = arith.mulf %327, %329 : vector<1x32xf32>
    %333 = arith.addf %331, %332 : vector<1x32xf32>
    %334 = math.tanh %333 : vector<1x32xf32>
    %335 = arith.mulf %330, %334 : vector<1x32xf32>
    %336 = arith.truncf %335 : vector<1x32xf32> to vector<1x32xbf16>
    %cst_80 = arith.constant dense<0.000000e+00> : vector<1x128xf32>
    %337 = tpu.matmul %336, %5, %cst_80 {dimension_numbers = #tpu.dot_dimension_numbers<[1], [0], [0], [1], [0, 0, 1, 1], [], []>} : vector<1x32xbf16>, vector<32x128xbf16>, vector<1x128xf32> -> vector<1x128xf32>
    %338 = arith.addf %316, %337 : vector<1x128xf32>
    %339 = arith.negf %338 : vector<1x128xf32>
    %340 = math.exp %339 : vector<1x128xf32>
    %cst_81 = arith.constant 1.000000e+00 : f32
    %341 = vector.broadcast %cst_81 : f32 to vector<1x128xf32>
    %342 = arith.addf %341, %340 : vector<1x128xf32>
    %343 = arith.divf %341, %342 : vector<1x128xf32>
    %344 = math.tanh %338 : vector<1x128xf32>
    %345 = vector.extract_strided_slice %343 {offsets = [0, 0], sizes = [1, 32], strides = [1, 1]} : vector<1x128xf32> to vector<1x32xf32>
    %346 = vector.extract_strided_slice %343 {offsets = [0, 32], sizes = [1, 32], strides = [1, 1]} : vector<1x128xf32> to vector<1x32xf32>
    %347 = vector.extract_strided_slice %344 {offsets = [0, 64], sizes = [1, 32], strides = [1, 1]} : vector<1x128xf32> to vector<1x32xf32>
    %348 = vector.extract_strided_slice %343 {offsets = [0, 96], sizes = [1, 32], strides = [1, 1]} : vector<1x128xf32> to vector<1x32xf32>
    %349 = arith.mulf %346, %310 : vector<1x32xf32>
    %350 = arith.mulf %345, %347 : vector<1x32xf32>
    %351 = arith.addf %349, %350 : vector<1x32xf32>
    %352 = math.tanh %351 : vector<1x32xf32>
    %353 = arith.mulf %348, %352 : vector<1x32xf32>
    %c7_82 = arith.constant 7 : index
    %c0_83 = arith.constant 0 : index
    %354 = vector.load %arg5[%c7_82, %c0_83] : memref<8x32xf32, #tpu.memory_space<vmem>>, vector<1x32xf32>
    tpu.vector_store %arg5[%c7_82, %c0_83], %353 {strides = array<i32>} : memref<8x32xf32, #tpu.memory_space<vmem>>, vector<1x32xf32>,
    %c0_84 = arith.constant 0 : index
    %c0_85 = arith.constant 0 : index
    %355 = vector.load %arg5[%c0_84, %c0_85] : memref<8x32xf32, #tpu.memory_space<vmem>>, vector<8x32xf32>
    %cst_86 = arith.constant dense<0.000000e+00> : vector<8x8xf32>
    %356 = tpu.matmul %355, %9, %cst_86 {dimension_numbers = #tpu.dot_dimension_numbers<[1], [0], [0], [1], [0, 0, 1, 1], [], []>} : vector<8x32xf32>, vector<32x8xf32>, vector<8x8xf32> -> vector<8x8xf32>
    %357 = vector.broadcast %10 : vector<1x8xf32> to vector<8x8xf32>
    %358 = arith.addf %356, %357 : vector<8x8xf32>
    %cst_87 = arith.constant dense<0xFF800000> : vector<8xf32>
    %359 = vector.multi_reduction <maximumf>, %358, %cst_87 [1] : vector<8x8xf32> to vector<8xf32>
    %360 = vector.shape_cast %359 : vector<8xf32> to vector<8x1xf32>
    %361 = vector.broadcast %360 : vector<8x1xf32> to vector<8x8xf32>
    %362 = arith.subf %358, %361 : vector<8x8xf32>
    %363 = math.exp %362 : vector<8x8xf32>
    %cst_88 = arith.constant dense<0.000000e+00> : vector<8xf32>
    %364 = vector.multi_reduction <add>, %363, %cst_88 [1] : vector<8x8xf32> to vector<8xf32>
    %365 = vector.shape_cast %364 : vector<8xf32> to vector<8x1xf32>
    %366 = vector.broadcast %365 : vector<8x1xf32> to vector<8x8xf32>
    %367 = arith.divf %363, %366 : vector<8x8xf32>
    %c0_89 = arith.constant 0 : index
    %c0_90 = arith.constant 0 : index
    %368 = vector.load %arg3[%c0_89, %c0_90] : memref<8x8xf32, #tpu.memory_space<vmem>>, vector<8x8xf32>
    tpu.vector_store %arg3[%c0_89, %c0_90], %367 {strides = array<i32>} : memref<8x8xf32, #tpu.memory_space<vmem>>, vector<8x8xf32>,
    return
  }
}

</mosaic_0001>

<llo_original>
// kernel: comb_forward.1
$region0: #{comb_forward.1}
  #allocation0 [shape = 'u32[]', space=smem, size = 0x4, offset = 0x4, fixed_abs, tag = 'smem constant byte address 0x4 - core index']
  #allocation1 [shape = 'u32[144,128]{1,0:T(1,128)}', space=vmem, size = 0x12000, scoped, tag = 'internal scratch']
  #allocation2 [shape = 'f32[8,128]{1,0:T(8,128)}', space=vmem, size = 0x1000, scoped, tag = 'scratch operand']
  #allocation3 [shape = 'f32[8,32]{1,0:T(8,128)}', space=vmem, size = 0x1000, scoped, tag = 'scratch operand']
  %s0 = inlined_call_operand.vmem [shape: s32[8,1], index: 0, kind: input, shape index: {}]
  %s1 = inlined_call_operand.vmem [shape: f32[51,16], index: 1, kind: input, shape index: {}]
  %s2 = inlined_call_operand.hbm [shape: f32[168,128], index: 2, kind: input, shape index: {}]
  %s3 = inlined_call_operand.hbm [shape: f32[8,8], index: 3, kind: output, shape index: {}]
  %s4 = sld [smem:[#allocation0]]
  $region26: #{comb_forward.1} parent=0
    _
  %s6 = ssub.s32 1, %s4
  %s7 = scalar_select 0, %s6, %s4
  $region1: #{comb_forward.1} parent=0
    #allocation4 [shape = 'u8[86016]{0}', space=vmem, size = 0x15000, scoped, tag = 'input window, operand 2, single buffered']
    #allocation5 [shape = 's32[1]{0}', space=sflag, size = 0x4, scoped, tag = 'scoped memory for comb_forward.1']
    #allocation6 [shape = 's32[1]{0}', space=sflag, size = 0x4, scoped, tag = 'scoped memory for comb_forward.1']
    #allocation7 [shape = 'u8[4096]{0}', space=vmem, size = 0x1000, scoped, tag = 'output window, operand 0, single buffered']
    %8 = vsyncpa [#allocation5], 0
    %9 = vsyncpa [#allocation6], 0
    // Predicated region
    $region2: #{comb_forward.1} parent=1 // pred_check
      _
    $region3: #{comb_forward.1} parent=1 // pred_check_branch
      %11 = sbr.rel (0) target = $region5
    $region4: #{comb_forward.1} parent=1 // pred_region
      _
    $region5: #{comb_forward.1} parent=1 // pred_fallthru
      _
    // Predicated region
    $region6: #{comb_forward.1} parent=1 // pred_check
      _
    $region7: #{comb_forward.1} parent=1 // pred_check_branch
      %13 = sbr.rel (0) target = $region9
    $region8: #{comb_forward.1} parent=1 // pred_region
      _
    $region9: #{comb_forward.1} parent=1 // pred_fallthru
      _
    // Predicated region
    $region10: #{comb_forward.1} parent=1 // pred_check
      _
    $region11: #{comb_forward.1} parent=1 // pred_check_branch
      %15 = sbr.rel (0) target = $region13
    $region12: #{comb_forward.1} parent=1 // pred_region
      %s17 = ssub.s32 2688, 2688
      %18 = vsyncadd [#allocation5], %s17
      %s19 = sshll.u32 [#allocation4], 4
      %s20 = int_to_ptr.vmem [resolvable:$true] %s19
      %25 = dma.hbm_to_vmem [thread:$0]  %s2, 2688, %s20, [#allocation5], 128, 128, 8
    $region13: #{comb_forward.1} parent=1 // pred_fallthru
      _
    // Predicated region
    $region14: #{comb_forward.1} parent=1 // pred_check
      _
    $region15: #{comb_forward.1} parent=1 // pred_check_branch
      %27 = sbr.rel (0) target = $region17
    $region16: #{comb_forward.1} parent=1 // pred_region
      %28 = dma.done [#allocation5], 2688
    $region17: #{comb_forward.1} parent=1 // pred_fallthru
      _
    %v30 = vld [vmem:[#allocation4] sm:$0xff]
    %v31 = vld [vmem:[#allocation4 + $0x8] sm:$0xff]
    %v32 = vld [vmem:[#allocation4 + $0x10] sm:$0xff]
    %v33 = vld [vmem:[#allocation4 + $0x18] sm:$0xff]
    %v34 = vld [vmem:[#allocation4 + $0x20] sm:$0xff]
    %v35 = vld [vmem:[#allocation4 + $0x28] sm:$0xff]
    %v36 = vpack.c.bf16 %v33, %v32
    %v37 = vpack.c.bf16 %v35, %v34
    %v38 = vld [vmem:[#allocation4 + $0x30] sm:$0x1]
    %v39 = vld [vmem:[#allocation4 + $0x38] sm:$0xff]
    %v40 = vld [vmem:[#allocation4 + $0x40] sm:$0xff]
    %v41 = vld [vmem:[#allocation4 + $0x48] sm:$0xff]
    %v42 = vld [vmem:[#allocation4 + $0x50] sm:$0xff]
    %v43 = vpack.c.bf16 %v40, %v39
    %v44 = vpack.c.bf16 %v42, %v41
    %v45 = vld [vmem:[#allocation4 + $0x58] sm:$0xff]
    %v46 = vld [vmem:[#allocation4 + $0x60] sm:$0xff]
    %v47 = vld [vmem:[#allocation4 + $0x68] sm:$0xff]
    %v48 = vld [vmem:[#allocation4 + $0x70] sm:$0xff]
    %v49 = vpack.c.bf16 %v46, %v45
    %v50 = vpack.c.bf16 %v48, %v47
    %v51 = vld [vmem:[#allocation4 + $0x78] sm:$0x1]
    %v52 = vld [vmem:[#allocation4 + $0x80] sm:$0xff]
    %v53 = vld [vmem:[#allocation4 + $0x88] sm:$0xff]
    %v54 = vld [vmem:[#allocation4 + $0x90] sm:$0xff]
    %v55 = vld [vmem:[#allocation4 + $0x98] sm:$0xff]
    %v56 = vld [vmem:[#allocation4 + $0xa0] sm:$0x1]
    %v57 = vld [vmem:[%s0] sm:$0xff]
    %v58 = vlaneseq
    %v59 = vand.u32 %v58, 127
    %60 = vset.pattern.permute.xlu0 0
    %61 = vperm.xlu0 %60, %v57
    %v62 = vpop.permute.xlu0 %61
    %vm63 = vcmp.eq.s32.totalorder %v59, %v62
    %v64 = vsel %vm63, 1, 0
    %v65 = vcvt.s32.f32 %v64
    %v66 = vld [vmem:[%s1] sm:$0xff]
    %v67 = vld [vmem:[%s1 + $0x8] sm:$0xff]
    %v68 = vld [vmem:[%s1 + $0x10] sm:$0xff]
    %v69 = vld [vmem:[%s1 + $0x18] sm:$0xff]
    %v70 = vld [vmem:[%s1 + $0x20] sm:$0xff]
    %v71 = vld [vmem:[%s1 + $0x28] sm:$0xff]
    %v72 = vld [vmem:[%s1 + $0x30] sm:$0x7]
    %vm73 = vcmask 416768
    %v75 = vsel %vm73, %v65, 0
    %vm77 = vcmask 1042432
    %v79 = vsel %vm77, %v72, 0
    %81 = vmatprep.subr.mxu0 0.0
    %82 = vmatpush1.msra.mxu0 %v66
    %83 = vmatprep.subr.mxu0 0.0
    %84 = vmatpush1.msra.mxu0 %v67
    %85 = vmatprep.subr.mxu0 0.0
    %86 = vmatpush1.msra.mxu0 %v68
    %87 = vmatprep.subr.mxu0 0.0
    %88 = vmatpush1.msra.mxu0 %v69
    %89 = vmatprep.subr.mxu0 0.0
    %90 = vmatpush1.msra.mxu0 %v70
    %91 = vmatprep.subr.mxu0 0.0
    %92 = vmatpush1.msra.mxu0 %v71
    %93 = vmatprep.subr.mxu0 0.0
    %94 = vmatpush1.msra.mxu0 %v79
    %95 = vmatprep.subr.mxu0 0.0
    %96 = vmatpush1.msra.mxu0 0.0
    %97 = vmatprep.subr.mxu0 0.0
    %98 = vmatpush1.msra.mxu0 0.0
    %99 = vmatprep.subr.mxu0 0.0
    %100 = vmatpush1.msra.mxu0 0.0
    %101 = vmatprep.subr.mxu0 0.0
    %102 = vmatpush1.msra.mxu0 0.0
    %103 = vmatprep.subr.mxu0 0.0
    %104 = vmatpush1.msra.mxu0 0.0
    %105 = vmatprep.subr.mxu0 0.0
    %106 = vmatpush1.msra.mxu0 0.0
    %107 = vmatprep.subr.mxu0 0.0
    %108 = vmatpush1.msra.mxu0 0.0
    %109 = vmatprep.subr.mxu0 0.0
    %110 = vmatpush1.msra.mxu0 0.0
    %111 = vmatprep.subr.mxu0 0.0
    %112 = vmatpush1.msra.mxu0 0.0
    %113 = vmatprep.subr.mxu0 0.0
    %114 = vmatpush1.msra.mxu0 0.0
    %115 = vmatprep.subr.mxu0 0.0
    %116 = vmatpush1.msra.mxu0 0.0
    %117 = vmatprep.subr.mxu0 0.0
    %118 = vmatpush1.msra.mxu0 0.0
    %119 = vmatprep.subr.mxu0 0.0
    %120 = vmatpush1.msra.mxu0 0.0
    %121 = vmatprep.subr.mxu0 0.0
    %122 = vmatpush1.msra.mxu0 0.0
    %123 = vmatprep.subr.mxu0 0.0
    %124 = vmatpush1.msra.mxu0 0.0
    %125 = vmatprep.subr.mxu0 0.0
    %126 = vmatpush1.msra.mxu0 0.0
    %127 = vmatprep.subr.mxu0 0.0
    %128 = vmatpush1.msra.mxu0 0.0
    %129 = vmatprep.subr.mxu0 0.0
    %130 = vmatpush1.msra.mxu0 0.0
    %131 = vmatprep.subr.mxu0 0.0
    %132 = vmatpush1.msra.mxu0 0.0
    %133 = vmatprep.subr.mxu0 0.0
    %134 = vmatpush1.msra.mxu0 0.0
    %135 = vmatprep.subr.mxu0 0.0
    %136 = vmatpush1.msra.mxu0 0.0
    %137 = vmatprep.subr.mxu0 0.0
    %138 = vmatpush1.msra.mxu0 0.0
    %139 = vmatprep.subr.mxu0 0.0
    %140 = vmatpush1.msra.mxu0 0.0
    %141 = vmatprep.subr.mxu0 0.0
    %142 = vmatpush1.msra.mxu0 0.0
    %143 = vmatprep.subr.mxu0 0.0
    %144 = vmatpush1.msra.mxu0 0.0
    %145 = vmatprep.mubr.f32.mxu0 0.0
    %146 = vmatmul.mubr.f32.gmra.mrb[0].mxu0 %v75
    %v147 = vpop.f32.mrb[0].mxu0
    %v148 = vadd.f32 0.0, %v147
    %v149 = vpop.f32.mrb[0].mxu0
    %150 = vdwg.mxu0
    %v151 = vlaneseq
    %v152 = vshrl.u32 %v151, 7
    %v153 = vsub.s32 0, %v152
    %v154 = vrot.slane %v38, %v153
    %vm155 = vcmask 130048
    %v157 = vsel %vm155, %v148, 0
    %159 = vmatprep.subr.mxu0 0.0
    %160 = vmatpush1.msra.mxu0 %v30
    %161 = vmatprep.subr.mxu0 0.0
    %162 = vmatpush1.msra.mxu0 %v31
    %163 = vmatprep.subr.mxu0 0.0
    %164 = vmatpush1.msra.mxu0 0.0
    %165 = vmatprep.subr.mxu0 0.0
    %166 = vmatpush1.msra.mxu0 0.0
    %167 = vmatprep.subr.mxu0 0.0
    %168 = vmatpush1.msra.mxu0 0.0
    %169 = vmatprep.subr.mxu0 0.0
    %170 = vmatpush1.msra.mxu0 0.0
    %171 = vmatprep.subr.mxu0 0.0
    %172 = vmatpush1.msra.mxu0 0.0
    %173 = vmatprep.subr.mxu0 0.0
    %174 = vmatpush1.msra.mxu0 0.0
    %175 = vmatprep.subr.mxu0 0.0
    %176 = vmatpush1.msra.mxu0 0.0
    %177 = vmatprep.subr.mxu0 0.0
    %178 = vmatpush1.msra.mxu0 0.0
    %179 = vmatprep.subr.mxu0 0.0
    %180 = vmatpush1.msra.mxu0 0.0
    %181 = vmatprep.subr.mxu0 0.0
    %182 = vmatpush1.msra.mxu0 0.0
    %183 = vmatprep.subr.mxu0 0.0
    %184 = vmatpush1.msra.mxu0 0.0
    %185 = vmatprep.subr.mxu0 0.0
    %186 = vmatpush1.msra.mxu0 0.0
    %187 = vmatprep.subr.mxu0 0.0
    %188 = vmatpush1.msra.mxu0 0.0
    %189 = vmatprep.subr.mxu0 0.0
    %190 = vmatpush1.msra.mxu0 0.0
    %191 = vmatprep.subr.mxu0 0.0
    %192 = vmatpush1.msra.mxu0 0.0
    %193 = vmatprep.subr.mxu0 0.0
    %194 = vmatpush1.msra.mxu0 0.0
    %195 = vmatprep.subr.mxu0 0.0
    %196 = vmatpush1.msra.mxu0 0.0
    %197 = vmatprep.subr.mxu0 0.0
    %198 = vmatpush1.msra.mxu0 0.0
    %199 = vmatprep.subr.mxu0 0.0
    %200 = vmatpush1.msra.mxu0 0.0
    %201 = vmatprep.subr.mxu0 0.0
    %202 = vmatpush1.msra.mxu0 0.0
    %203 = vmatprep.subr.mxu0 0.0
    %204 = vmatpush1.msra.mxu0 0.0
    %205 = vmatprep.subr.mxu0 0.0
    %206 = vmatpush1.msra.mxu0 0.0
    %207 = vmatprep.subr.mxu0 0.0
    %208 = vmatpush1.msra.mxu0 0.0
    %209 = vmatprep.subr.mxu0 0.0
    %210 = vmatpush1.msra.mxu0 0.0
    %211 = vmatprep.subr.mxu0 0.0
    %212 = vmatpush1.msra.mxu0 0.0
    %213 = vmatprep.subr.mxu0 0.0
    %214 = vmatpush1.msra.mxu0 0.0
    %215 = vmatprep.subr.mxu0 0.0
    %216 = vmatpush1.msra.mxu0 0.0
    %217 = vmatprep.subr.mxu0 0.0
    %218 = vmatpush1.msra.mxu0 0.0
    %219 = vmatprep.subr.mxu0 0.0
    %220 = vmatpush1.msra.mxu0 0.0
    %221 = vmatprep.subr.mxu0 0.0
    %222 = vmatpush1.msra.mxu0 0.0
    %223 = vmatprep.mubr.f32.mxu0 0.0
    %224 = vmatmul.mubr.f32.gmra.mrb[0].mxu0 %v157
    %v225 = vpop.f32.mrb[0].mxu0
    %v226 = vadd.f32 %v154, %v225
    %v227 = vpop.f32.mrb[0].mxu0
    %228 = vdwg.mxu0
    %229 = vst [vmem:[#allocation2] sm:$0xff] %v226
    %vm230 = vcmask 261120
    %v232 = vsel %vm230, 0, 0
    %234 = vmatprep.subr.bf16.mxu0 0
    %235 = vmatpush1.bf16.msra.mxu0 %v49
    %236 = vmatprep.subr.bf16.mxu0 0
    %237 = vmatpush1.bf16.msra.mxu0 %v50
    %238 = vmatprep.subr.bf16.mxu0 0
    %239 = vmatpush1.bf16.msra.mxu0 0
    %240 = vmatprep.subr.bf16.mxu0 0
    %241 = vmatpush1.bf16.msra.mxu0 0
    %242 = vmatprep.subr.bf16.mxu0 0
    %243 = vmatpush1.bf16.msra.mxu0 0
    %244 = vmatprep.subr.bf16.mxu0 0
    %245 = vmatpush1.bf16.msra.mxu0 0
    %246 = vmatprep.subr.bf16.mxu0 0
    %247 = vmatpush1.bf16.msra.mxu0 0
    %248 = vmatprep.subr.bf16.mxu0 0
    %249 = vmatpush1.bf16.msra.mxu0 0
    %250 = vmatprep.subr.bf16.mxu0 0
    %251 = vmatpush1.bf16.msra.mxu0 0
    %252 = vmatprep.subr.bf16.mxu0 0
    %253 = vmatpush1.bf16.msra.mxu0 0
    %254 = vmatprep.subr.bf16.mxu0 0
    %255 = vmatpush1.bf16.msra.mxu0 0
    %256 = vmatprep.subr.bf16.mxu0 0
    %257 = vmatpush1.bf16.msra.mxu0 0
    %258 = vmatprep.subr.bf16.mxu0 0
    %259 = vmatpush1.bf16.msra.mxu0 0
    %260 = vmatprep.subr.bf16.mxu0 0
    %261 = vmatpush1.bf16.msra.mxu0 0
    %262 = vmatprep.subr.bf16.mxu0 0
    %263 = vmatpush1.bf16.msra.mxu0 0
    %264 = vmatprep.subr.bf16.mxu0 0
    %265 = vmatpush1.bf16.msra.mxu0 0
    %266 = vmatprep.mubr.bf16.mxu0 0
    %267 = vmatmul.mubr.bf16.gmra.mrb[0].mxu0 %v232
    %v268 = vpop.f32.mrb[0].mxu0
    %v269 = vadd.f32 %v51, %v268
    %v270 = vpop.f32.mrb[0].mxu0
    %v271 = vpop.f32.mrb[0].mxu0
    %v272 = vpop.f32.mrb[0].mxu0
    %273 = vdwg.mxu0
    %v274 = vld [vmem:[#allocation2] sm:$0x1]
    %275 = vmatprep.subr.bf16.mxu0 0
    %276 = vmatpush1.bf16.msra.mxu0 %v36
    %277 = vmatprep.subr.bf16.mxu0 0
    %278 = vmatpush1.bf16.msra.mxu0 %v37
    %279 = vmatprep.subr.bf16.mxu0 0
    %280 = vmatpush1.bf16.msra.mxu0 0
    %281 = vmatprep.subr.bf16.mxu0 0
    %282 = vmatpush1.bf16.msra.mxu0 0
    %283 = vmatprep.subr.bf16.mxu0 0
    %284 = vmatpush1.bf16.msra.mxu0 0
    %285 = vmatprep.subr.bf16.mxu0 0
    %286 = vmatpush1.bf16.msra.mxu0 0
    %287 = vmatprep.subr.bf16.mxu0 0
    %288 = vmatpush1.bf16.msra.mxu0 0
    %289 = vmatprep.subr.bf16.mxu0 0
    %290 = vmatpush1.bf16.msra.mxu0 0
    %291 = vmatprep.subr.bf16.mxu0 0
    %292 = vmatpush1.bf16.msra.mxu0 0
    %293 = vmatprep.subr.bf16.mxu0 0
    %294 = vmatpush1.bf16.msra.mxu0 0
    %295 = vmatprep.subr.bf16.mxu0 0
    %296 = vmatpush1.bf16.msra.mxu0 0
    %297 = vmatprep.subr.bf16.mxu0 0
    %298 = vmatpush1.bf16.msra.mxu0 0
    %299 = vmatprep.subr.bf16.mxu0 0
    %300 = vmatpush1.bf16.msra.mxu0 0
    %301 = vmatprep.subr.bf16.mxu0 0
    %302 = vmatpush1.bf16.msra.mxu0 0
    %303 = vmatprep.subr.bf16.mxu0 0
    %304 = vmatpush1.bf16.msra.mxu0 0
    %305 = vmatprep.subr.bf16.mxu0 0
    %306 = vmatpush1.bf16.msra.mxu0 0
    %307 = vmatprep.mubr.bf16.mxu0 0
    %308 = vmatmul.mubr.bf16.gmra.mrb[0].mxu0 %v232
    %v309 = vpop.f32.mrb[0].mxu0
    %v310 = vadd.f32 0.0, %v309
    %v311 = vpop.f32.mrb[0].mxu0
    %v312 = vpop.f32.mrb[0].mxu0
    %v313 = vpop.f32.mrb[0].mxu0
    %314 = vdwg.mxu0
    %v315 = vadd.f32 %v274, %v310
    %v316 = vxor.u32 %v315, 2147483648
    %v317 = vmul.f32 %v316, 1.442695
    %v318 = vpow.pop %v317
    %v319 = vadd.f32 %v318, 1.0
    %v320 = vrcp.pop %v319
    %v321 = vmul.f32 1.0, %v320
    %v322 = vtanh.pop %v315
    %v323 = vmul.f32 %v321, 0.0
    %325 = vrot.lane.b32.xlu0 %v322, 64
    %v326 = vpop.permute.xlu0 %325
    %v328 = vmul.f32 %v321, %v326
    %330 = vrot.lane.b32.xlu0 %v328, 32
    %v331 = vpop.permute.xlu0 %330
    %v333 = vadd.f32 %v323, %v331
    %v334 = vtanh.pop %v333
    %336 = vrot.lane.b32.xlu0 %v334, 64
    %v337 = vpop.permute.xlu0 %336
    %v339 = vmul.f32 %v321, %v337
    %v340 = vpack.c.bf16 %v339, %v339
    %342 = vrot.lane.b32.xlu0 %v340, 32
    %v343 = vpop.permute.xlu0 %342
    %v345 = vsel %vm230, %v343, 0
    %347 = vmatprep.subr.bf16.mxu0 0
    %348 = vmatpush1.bf16.msra.mxu0 %v43
    %349 = vmatprep.subr.bf16.mxu0 0
    %350 = vmatpush1.bf16.msra.mxu0 %v44
    %351 = vmatprep.subr.bf16.mxu0 0
    %352 = vmatpush1.bf16.msra.mxu0 0
    %353 = vmatprep.subr.bf16.mxu0 0
    %354 = vmatpush1.bf16.msra.mxu0 0
    %355 = vmatprep.subr.bf16.mxu0 0
    %356 = vmatpush1.bf16.msra.mxu0 0
    %357 = vmatprep.subr.bf16.mxu0 0
    %358 = vmatpush1.bf16.msra.mxu0 0
    %359 = vmatprep.subr.bf16.mxu0 0
    %360 = vmatpush1.bf16.msra.mxu0 0
    %361 = vmatprep.subr.bf16.mxu0 0
    %362 = vmatpush1.bf16.msra.mxu0 0
    %363 = vmatprep.subr.bf16.mxu0 0
    %364 = vmatpush1.bf16.msra.mxu0 0
    %365 = vmatprep.subr.bf16.mxu0 0
    %366 = vmatpush1.bf16.msra.mxu0 0
    %367 = vmatprep.subr.bf16.mxu0 0
    %368 = vmatpush1.bf16.msra.mxu0 0
    %369 = vmatprep.subr.bf16.mxu0 0
    %370 = vmatpush1.bf16.msra.mxu0 0
    %371 = vmatprep.subr.bf16.mxu0 0
    %372 = vmatpush1.bf16.msra.mxu0 0
    %373 = vmatprep.subr.bf16.mxu0 0
    %374 = vmatpush1.bf16.msra.mxu0 0
    %375 = vmatprep.subr.bf16.mxu0 0
    %376 = vmatpush1.bf16.msra.mxu0 0
    %377 = vmatprep.subr.bf16.mxu0 0
    %378 = vmatpush1.bf16.msra.mxu0 0
    %379 = vmatprep.mubr.bf16.mxu0 0
    %380 = vmatmul.mubr.bf16.gmra.mrb[0].mxu0 %v345
    %v381 = vpop.f32.mrb[0].mxu0
    %v382 = vadd.f32 0.0, %v381
    %v383 = vpop.f32.mrb[0].mxu0
    %v384 = vpop.f32.mrb[0].mxu0
    %v385 = vpop.f32.mrb[0].mxu0
    %386 = vdwg.mxu0
    %v387 = vadd.f32 %v269, %v382
    %v388 = vxor.u32 %v387, 2147483648
    %v389 = vmul.f32 %v388, 1.442695
    %v390 = vpow.pop %v389
    %v391 = vadd.f32 %v390, 1.0
    %v392 = vrcp.pop %v391
    %v393 = vmul.f32 1.0, %v392
    %v394 = vtanh.pop %v387
    %v395 = vmul.f32 %v393, 0.0
    %397 = vrot.lane.b32.xlu0 %v394, 64
    %v398 = vpop.permute.xlu0 %397
    %v400 = vmul.f32 %v393, %v398
    %402 = vrot.lane.b32.xlu0 %v400, 32
    %v403 = vpop.permute.xlu0 %402
    %v405 = vadd.f32 %v395, %v403
    %v406 = vtanh.pop %v405
    %408 = vrot.lane.b32.xlu0 %v406, 64
    %v409 = vpop.permute.xlu0 %408
    %v411 = vmul.f32 %v393, %v409
    %413 = vrot.lane.b32.xlu0 %v411, 32
    %v414 = vpop.permute.xlu0 %413
    %vm416 = vcmask 253952
    %417 = vst.msk [vmem:[#allocation3] sm:$0x1] %vm416, %v414
    %v418 = vpack.c.bf16 %v411, %v411
    %420 = vrot.lane.b32.xlu0 %v418, 32
    %v421 = vpop.permute.xlu0 %420
    %v423 = vsel %vm230, %v421, 0
    %425 = vmatprep.subr.bf16.mxu0 0
    %426 = vmatpush1.bf16.msra.mxu0 %v49
    %427 = vmatprep.subr.bf16.mxu0 0
    %428 = vmatpush1.bf16.msra.mxu0 %v50
    %429 = vmatprep.subr.bf16.mxu0 0
    %430 = vmatpush1.bf16.msra.mxu0 0
    %431 = vmatprep.subr.bf16.mxu0 0
    %432 = vmatpush1.bf16.msra.mxu0 0
    %433 = vmatprep.subr.bf16.mxu0 0
    %434 = vmatpush1.bf16.msra.mxu0 0
    %435 = vmatprep.subr.bf16.mxu0 0
    %436 = vmatpush1.bf16.msra.mxu0 0
    %437 = vmatprep.subr.bf16.mxu0 0
    %438 = vmatpush1.bf16.msra.mxu0 0
    %439 = vmatprep.subr.bf16.mxu0 0
    %440 = vmatpush1.bf16.msra.mxu0 0
    %441 = vmatprep.subr.bf16.mxu0 0
    %442 = vmatpush1.bf16.msra.mxu0 0
    %443 = vmatprep.subr.bf16.mxu0 0
    %444 = vmatpush1.bf16.msra.mxu0 0
    %445 = vmatprep.subr.bf16.mxu0 0
    %446 = vmatpush1.bf16.msra.mxu0 0
    %447 = vmatprep.subr.bf16.mxu0 0
    %448 = vmatpush1.bf16.msra.mxu0 0
    %449 = vmatprep.subr.bf16.mxu0 0
    %450 = vmatpush1.bf16.msra.mxu0 0
    %451 = vmatprep.subr.bf16.mxu0 0
    %452 = vmatpush1.bf16.msra.mxu0 0
    %453 = vmatprep.subr.bf16.mxu0 0
    %454 = vmatpush1.bf16.msra.mxu0 0
    %455 = vmatprep.subr.bf16.mxu0 0
    %456 = vmatpush1.bf16.msra.mxu0 0
    %457 = vmatprep.mubr.bf16.mxu0 0
    %458 = vmatmul.mubr.bf16.gmra.mrb[0].mxu0 %v423
    %v459 = vpop.f32.mrb[0].mxu0
    %v460 = vadd.f32 %v51, %v459
    %v461 = vpop.f32.mrb[0].mxu0
    %v462 = vpop.f32.mrb[0].mxu0
    %v463 = vpop.f32.mrb[0].mxu0
    %464 = vdwg.mxu0
    %v465 = vld [vmem:[#allocation2 + $0x1] sm:$0x1]
    %466 = vmatprep.subr.bf16.mxu0 0
    %467 = vmatpush1.bf16.msra.mxu0 %v36
    %468 = vmatprep.subr.bf16.mxu0 0
    %469 = vmatpush1.bf16.msra.mxu0 %v37
    %470 = vmatprep.subr.bf16.mxu0 0
    %471 = vmatpush1.bf16.msra.mxu0 0
    %472 = vmatprep.subr.bf16.mxu0 0
    %473 = vmatpush1.bf16.msra.mxu0 0
    %474 = vmatprep.subr.bf16.mxu0 0
    %475 = vmatpush1.bf16.msra.mxu0 0
    %476 = vmatprep.subr.bf16.mxu0 0
    %477 = vmatpush1.bf16.msra.mxu0 0
    %478 = vmatprep.subr.bf16.mxu0 0
    %479 = vmatpush1.bf16.msra.mxu0 0
    %480 = vmatprep.subr.bf16.mxu0 0
    %481 = vmatpush1.bf16.msra.mxu0 0
    %482 = vmatprep.subr.bf16.mxu0 0
    %483 = vmatpush1.bf16.msra.mxu0 0
    %484 = vmatprep.subr.bf16.mxu0 0
    %485 = vmatpush1.bf16.msra.mxu0 0
    %486 = vmatprep.subr.bf16.mxu0 0
    %487 = vmatpush1.bf16.msra.mxu0 0
    %488 = vmatprep.subr.bf16.mxu0 0
    %489 = vmatpush1.bf16.msra.mxu0 0
    %490 = vmatprep.subr.bf16.mxu0 0
    %491 = vmatpush1.bf16.msra.mxu0 0
    %492 = vmatprep.subr.bf16.mxu0 0
    %493 = vmatpush1.bf16.msra.mxu0 0
    %494 = vmatprep.subr.bf16.mxu0 0
    %495 = vmatpush1.bf16.msra.mxu0 0
    %496 = vmatprep.subr.bf16.mxu0 0
    %497 = vmatpush1.bf16.msra.mxu0 0
    %498 = vmatprep.mubr.bf16.mxu0 0
    %499 = vmatmul.mubr.bf16.gmra.mrb[0].mxu0 %v345
    %v500 = vpop.f32.mrb[0].mxu0
    %v501 = vadd.f32 0.0, %v500
    %v502 = vpop.f32.mrb[0].mxu0
    %v503 = vpop.f32.mrb[0].mxu0
    %v504 = vpop.f32.mrb[0].mxu0
    %505 = vdwg.mxu0
    %v506 = vadd.f32 %v465, %v501
    %v507 = vxor.u32 %v506, 2147483648
    %v508 = vmul.f32 %v507, 1.442695
    %v509 = vpow.pop %v508
    %v510 = vadd.f32 %v509, 1.0
    %v511 = vrcp.pop %v510
    %v512 = vmul.f32 1.0, %v511
    %v513 = vtanh.pop %v506
    %v514 = vmul.f32 %v512, %v333
    %516 = vrot.lane.b32.xlu0 %v513, 64
    %v517 = vpop.permute.xlu0 %516
    %v519 = vmul.f32 %v512, %v517
    %521 = vrot.lane.b32.xlu0 %v519, 32
    %v522 = vpop.permute.xlu0 %521
    %v524 = vadd.f32 %v514, %v522
    %v525 = vtanh.pop %v524
    %527 = vrot.lane.b32.xlu0 %v525, 64
    %v528 = vpop.permute.xlu0 %527
    %v530 = vmul.f32 %v512, %v528
    %v531 = vpack.c.bf16 %v530, %v530
    %533 = vrot.lane.b32.xlu0 %v531, 32
    %v534 = vpop.permute.xlu0 %533
    %v536 = vsel %vm230, %v534, 0
    %538 = vmatprep.subr.bf16.mxu0 0
    %539 = vmatpush1.bf16.msra.mxu0 %v43
    %540 = vmatprep.subr.bf16.mxu0 0
    %541 = vmatpush1.bf16.msra.mxu0 %v44
    %542 = vmatprep.subr.bf16.mxu0 0
    %543 = vmatpush1.bf16.msra.mxu0 0
    %544 = vmatprep.subr.bf16.mxu0 0
    %545 = vmatpush1.bf16.msra.mxu0 0
    %546 = vmatprep.subr.bf16.mxu0 0
    %547 = vmatpush1.bf16.msra.mxu0 0
    %548 = vmatprep.subr.bf16.mxu0 0
    %549 = vmatpush1.bf16.msra.mxu0 0
    %550 = vmatprep.subr.bf16.mxu0 0
    %551 = vmatpush1.bf16.msra.mxu0 0
    %552 = vmatprep.subr.bf16.mxu0 0
    %553 = vmatpush1.bf16.msra.mxu0 0
    %554 = vmatprep.subr.bf16.mxu0 0
    %555 = vmatpush1.bf16.msra.mxu0 0
    %556 = vmatprep.subr.bf16.mxu0 0
    %557 = vmatpush1.bf16.msra.mxu0 0
    %558 = vmatprep.subr.bf16.mxu0 0
    %559 = vmatpush1.bf16.msra.mxu0 0
    %560 = vmatprep.subr.bf16.mxu0 0
    %561 = vmatpush1.bf16.msra.mxu0 0
    %562 = vmatprep.subr.bf16.mxu0 0
    %563 = vmatpush1.bf16.msra.mxu0 0
    %564 = vmatprep.subr.bf16.mxu0 0
    %565 = vmatpush1.bf16.msra.mxu0 0
    %566 = vmatprep.subr.bf16.mxu0 0
    %567 = vmatpush1.bf16.msra.mxu0 0
    %568 = vmatprep.subr.bf16.mxu0 0
    %569 = vmatpush1.bf16.msra.mxu0 0
    %570 = vmatprep.mubr.bf16.mxu0 0
    %571 = vmatmul.mubr.bf16.gmra.mrb[0].mxu0 %v536
    %v572 = vpop.f32.mrb[0].mxu0
    %v573 = vadd.f32 0.0, %v572
    %v574 = vpop.f32.mrb[0].mxu0
    %v575 = vpop.f32.mrb[0].mxu0
    %v576 = vpop.f32.mrb[0].mxu0
    %577 = vdwg.mxu0
    %v578 = vadd.f32 %v460, %v573
    %v579 = vxor.u32 %v578, 2147483648
    %v580 = vmul.f32 %v579, 1.442695
    %v581 = vpow.pop %v580
    %v582 = vadd.f32 %v581, 1.0
    %v583 = vrcp.pop %v582
    %v584 = vmul.f32 1.0, %v583
    %v585 = vtanh.pop %v578
    %v586 = vmul.f32 %v584, %v405
    %588 = vrot.lane.b32.xlu0 %v585, 64
    %v589 = vpop.permute.xlu0 %588
    %v591 = vmul.f32 %v584, %v589
    %593 = vrot.lane.b32.xlu0 %v591, 32
    %v594 = vpop.permute.xlu0 %593
    %v596 = vadd.f32 %v586, %v594
    %v597 = vtanh.pop %v596
    %599 = vrot.lane.b32.xlu0 %v597, 64
    %v600 = vpop.permute.xlu0 %599
    %v602 = vmul.f32 %v584, %v600
    %604 = vrot.lane.b32.xlu0 %v602, 32
    %v605 = vpop.permute.xlu0 %604
    %607 = vst.msk [vmem:[#allocation3 + $0x1] sm:$0x1] %vm416, %v605
    %v608 = vpack.c.bf16 %v602, %v602
    %610 = vrot.lane.b32.xlu0 %v608, 32
    %v611 = vpop.permute.xlu0 %610
    %v613 = vsel %vm230, %v611, 0
    %615 = vmatprep.subr.bf16.mxu0 0
    %616 = vmatpush1.bf16.msra.mxu0 %v49
    %617 = vmatprep.subr.bf16.mxu0 0
    %618 = vmatpush1.bf16.msra.mxu0 %v50
    %619 = vmatprep.subr.bf16.mxu0 0
    %620 = vmatpush1.bf16.msra.mxu0 0
    %621 = vmatprep.subr.bf16.mxu0 0
    %622 = vmatpush1.bf16.msra.mxu0 0
    %623 = vmatprep.subr.bf16.mxu0 0
    %624 = vmatpush1.bf16.msra.mxu0 0
    %625 = vmatprep.subr.bf16.mxu0 0
    %626 = vmatpush1.bf16.msra.mxu0 0
    %627 = vmatprep.subr.bf16.mxu0 0
    %628 = vmatpush1.bf16.msra.mxu0 0
    %629 = vmatprep.subr.bf16.mxu0 0
    %630 = vmatpush1.bf16.msra.mxu0 0
    %631 = vmatprep.subr.bf16.mxu0 0
    %632 = vmatpush1.bf16.msra.mxu0 0
    %633 = vmatprep.subr.bf16.mxu0 0
    %634 = vmatpush1.bf16.msra.mxu0 0
    %635 = vmatprep.subr.bf16.mxu0 0
    %636 = vmatpush1.bf16.msra.mxu0 0
    %637 = vmatprep.subr.bf16.mxu0 0
    %638 = vmatpush1.bf16.msra.mxu0 0
    %639 = vmatprep.subr.bf16.mxu0 0
    %640 = vmatpush1.bf16.msra.mxu0 0
    %641 = vmatprep.subr.bf16.mxu0 0
    %642 = vmatpush1.bf16.msra.mxu0 0
    %643 = vmatprep.subr.bf16.mxu0 0
    %644 = vmatpush1.bf16.msra.mxu0 0
    %645 = vmatprep.subr.bf16.mxu0 0
    %646 = vmatpush1.bf16.msra.mxu0 0
    %647 = vmatprep.mubr.bf16.mxu0 0
    %648 = vmatmul.mubr.bf16.gmra.mrb[0].mxu0 %v613
    %v649 = vpop.f32.mrb[0].mxu0
    %v650 = vadd.f32 %v51, %v649
    %v651 = vpop.f32.mrb[0].mxu0
    %v652 = vpop.f32.mrb[0].mxu0
    %v653 = vpop.f32.mrb[0].mxu0
    %654 = vdwg.mxu0
    %v655 = vld [vmem:[#allocation2 + $0x2] sm:$0x1]
    %656 = vmatprep.subr.bf16.mxu0 0
    %657 = vmatpush1.bf16.msra.mxu0 %v36
    %658 = vmatprep.subr.bf16.mxu0 0
    %659 = vmatpush1.bf16.msra.mxu0 %v37
    %660 = vmatprep.subr.bf16.mxu0 0
    %661 = vmatpush1.bf16.msra.mxu0 0
    %662 = vmatprep.subr.bf16.mxu0 0
    %663 = vmatpush1.bf16.msra.mxu0 0
    %664 = vmatprep.subr.bf16.mxu0 0
    %665 = vmatpush1.bf16.msra.mxu0 0
    %666 = vmatprep.subr.bf16.mxu0 0
    %667 = vmatpush1.bf16.msra.mxu0 0
    %668 = vmatprep.subr.bf16.mxu0 0
    %669 = vmatpush1.bf16.msra.mxu0 0
    %670 = vmatprep.subr.bf16.mxu0 0
    %671 = vmatpush1.bf16.msra.mxu0 0
    %672 = vmatprep.subr.bf16.mxu0 0
    %673 = vmatpush1.bf16.msra.mxu0 0
    %674 = vmatprep.subr.bf16.mxu0 0
    %675 = vmatpush1.bf16.msra.mxu0 0
    %676 = vmatprep.subr.bf16.mxu0 0
    %677 = vmatpush1.bf16.msra.mxu0 0
    %678 = vmatprep.subr.bf16.mxu0 0
    %679 = vmatpush1.bf16.msra.mxu0 0
    %680 = vmatprep.subr.bf16.mxu0 0
    %681 = vmatpush1.bf16.msra.mxu0 0
    %682 = vmatprep.subr.bf16.mxu0 0
    %683 = vmatpush1.bf16.msra.mxu0 0
    %684 = vmatprep.subr.bf16.mxu0 0
    %685 = vmatpush1.bf16.msra.mxu0 0
    %686 = vmatprep.subr.bf16.mxu0 0
    %687 = vmatpush1.bf16.msra.mxu0 0
    %688 = vmatprep.mubr.bf16.mxu0 0
    %689 = vmatmul.mubr.bf16.gmra.mrb[0].mxu0 %v536
    %v690 = vpop.f32.mrb[0].mxu0
    %v691 = vadd.f32 0.0, %v690
    %v692 = vpop.f32.mrb[0].mxu0
    %v693 = vpop.f32.mrb[0].mxu0
    %v694 = vpop.f32.mrb[0].mxu0
    %695 = vdwg.mxu0
    %v696 = vadd.f32 %v655, %v691
    %v697 = vxor.u32 %v696, 2147483648
    %v698 = vmul.f32 %v697, 1.442695
    %v699 = vpow.pop %v698
    %v700 = vadd.f32 %v699, 1.0
    %v701 = vrcp.pop %v700
    %v702 = vmul.f32 1.0, %v701
    %v703 = vtanh.pop %v696
    %v704 = vmul.f32 %v702, %v524
    %706 = vrot.lane.b32.xlu0 %v703, 64
    %v707 = vpop.permute.xlu0 %706
    %v709 = vmul.f32 %v702, %v707
    %711 = vrot.lane.b32.xlu0 %v709, 32
    %v712 = vpop.permute.xlu0 %711
    %v714 = vadd.f32 %v704, %v712
    %v715 = vtanh.pop %v714
    %717 = vrot.lane.b32.xlu0 %v715, 64
    %v718 = vpop.permute.xlu0 %717
    %v720 = vmul.f32 %v702, %v718
    %v721 = vpack.c.bf16 %v720, %v720
    %723 = vrot.lane.b32.xlu0 %v721, 32
    %v724 = vpop.permute.xlu0 %723
    %v726 = vsel %vm230, %v724, 0
    %728 = vmatprep.subr.bf16.mxu0 0
    %729 = vmatpush1.bf16.msra.mxu0 %v43
    %730 = vmatprep.subr.bf16.mxu0 0
    %731 = vmatpush1.bf16.msra.mxu0 %v44
    %732 = vmatprep.subr.bf16.mxu0 0
    %733 = vmatpush1.bf16.msra.mxu0 0
    %734 = vmatprep.subr.bf16.mxu0 0
    %735 = vmatpush1.bf16.msra.mxu0 0
    %736 = vmatprep.subr.bf16.mxu0 0
    %737 = vmatpush1.bf16.msra.mxu0 0
    %738 = vmatprep.subr.bf16.mxu0 0
    %739 = vmatpush1.bf16.msra.mxu0 0
    %740 = vmatprep.subr.bf16.mxu0 0
    %741 = vmatpush1.bf16.msra.mxu0 0
    %742 = vmatprep.subr.bf16.mxu0 0
    %743 = vmatpush1.bf16.msra.mxu0 0
    %744 = vmatprep.subr.bf16.mxu0 0
    %745 = vmatpush1.bf16.msra.mxu0 0
    %746 = vmatprep.subr.bf16.mxu0 0
    %747 = vmatpush1.bf16.msra.mxu0 0
    %748 = vmatprep.subr.bf16.mxu0 0
    %749 = vmatpush1.bf16.msra.mxu0 0
    %750 = vmatprep.subr.bf16.mxu0 0
    %751 = vmatpush1.bf16.msra.mxu0 0
    %752 = vmatprep.subr.bf16.mxu0 0
    %753 = vmatpush1.bf16.msra.mxu0 0
    %754 = vmatprep.subr.bf16.mxu0 0
    %755 = vmatpush1.bf16.msra.mxu0 0
    %756 = vmatprep.subr.bf16.mxu0 0
    %757 = vmatpush1.bf16.msra.mxu0 0
    %758 = vmatprep.subr.bf16.mxu0 0
    %759 = vmatpush1.bf16.msra.mxu0 0
    %760 = vmatprep.mubr.bf16.mxu0 0
    %761 = vmatmul.mubr.bf16.gmra.mrb[0].mxu0 %v726
    %v762 = vpop.f32.mrb[0].mxu0
    %v763 = vadd.f32 0.0, %v762
    %v764 = vpop.f32.mrb[0].mxu0
    %v765 = vpop.f32.mrb[0].mxu0
    %v766 = vpop.f32.mrb[0].mxu0
    %767 = vdwg.mxu0
    %v768 = vadd.f32 %v650, %v763
    %v769 = vxor.u32 %v768, 2147483648
    %v770 = vmul.f32 %v769, 1.442695
    %v771 = vpow.pop %v770
    %v772 = vadd.f32 %v771, 1.0
    %v773 = vrcp.pop %v772
    %v774 = vmul.f32 1.0, %v773
    %v775 = vtanh.pop %v768
    %v776 = vmul.f32 %v774, %v596
    %778 = vrot.lane.b32.xlu0 %v775, 64
    %v779 = vpop.permute.xlu0 %778
    %v781 = vmul.f32 %v774, %v779
    %783 = vrot.lane.b32.xlu0 %v781, 32
    %v784 = vpop.permute.xlu0 %783
    %v786 = vadd.f32 %v776, %v784
    %v787 = vtanh.pop %v786
    %789 = vrot.lane.b32.xlu0 %v787, 64
    %v790 = vpop.permute.xlu0 %789
    %v792 = vmul.f32 %v774, %v790
    %794 = vrot.lane.b32.xlu0 %v792, 32
    %v795 = vpop.permute.xlu0 %794
    %797 = vst.msk [vmem:[#allocation3 + $0x2] sm:$0x1] %vm416, %v795
    %v798 = vpack.c.bf16 %v792, %v792
    %800 = vrot.lane.b32.xlu0 %v798, 32
    %v801 = vpop.permute.xlu0 %800
    %v803 = vsel %vm230, %v801, 0
    %805 = vmatprep.subr.bf16.mxu0 0
    %806 = vmatpush1.bf16.msra.mxu0 %v49
    %807 = vmatprep.subr.bf16.mxu0 0
    %808 = vmatpush1.bf16.msra.mxu0 %v50
    %809 = vmatprep.subr.bf16.mxu0 0
    %810 = vmatpush1.bf16.msra.mxu0 0
    %811 = vmatprep.subr.bf16.mxu0 0
    %812 = vmatpush1.bf16.msra.mxu0 0
    %813 = vmatprep.subr.bf16.mxu0 0
    %814 = vmatpush1.bf16.msra.mxu0 0
    %815 = vmatprep.subr.bf16.mxu0 0
    %816 = vmatpush1.bf16.msra.mxu0 0
    %817 = vmatprep.subr.bf16.mxu0 0
    %818 = vmatpush1.bf16.msra.mxu0 0
    %819 = vmatprep.subr.bf16.mxu0 0
    %820 = vmatpush1.bf16.msra.mxu0 0
    %821 = vmatprep.subr.bf16.mxu0 0
    %822 = vmatpush1.bf16.msra.mxu0 0
    %823 = vmatprep.subr.bf16.mxu0 0
    %824 = vmatpush1.bf16.msra.mxu0 0
    %825 = vmatprep.subr.bf16.mxu0 0
    %826 = vmatpush1.bf16.msra.mxu0 0
    %827 = vmatprep.subr.bf16.mxu0 0
    %828 = vmatpush1.bf16.msra.mxu0 0
    %829 = vmatprep.subr.bf16.mxu0 0
    %830 = vmatpush1.bf16.msra.mxu0 0
    %831 = vmatprep.subr.bf16.mxu0 0
    %832 = vmatpush1.bf16.msra.mxu0 0
    %833 = vmatprep.subr.bf16.mxu0 0
    %834 = vmatpush1.bf16.msra.mxu0 0
    %835 = vmatprep.subr.bf16.mxu0 0
    %836 = vmatpush1.bf16.msra.mxu0 0
    %837 = vmatprep.mubr.bf16.mxu0 0
    %838 = vmatmul.mubr.bf16.gmra.mrb[0].mxu0 %v803
    %v839 = vpop.f32.mrb[0].mxu0
    %v840 = vadd.f32 %v51, %v839
    %v841 = vpop.f32.mrb[0].mxu0
    %v842 = vpop.f32.mrb[0].mxu0
    %v843 = vpop.f32.mrb[0].mxu0
    %844 = vdwg.mxu0
    %v845 = vld [vmem:[#allocation2 + $0x3] sm:$0x1]
    %846 = vmatprep.subr.bf16.mxu0 0
    %847 = vmatpush1.bf16.msra.mxu0 %v36
    %848 = vmatprep.subr.bf16.mxu0 0
    %849 = vmatpush1.bf16.msra.mxu0 %v37
    %850 = vmatprep.subr.bf16.mxu0 0
    %851 = vmatpush1.bf16.msra.mxu0 0
    %852 = vmatprep.subr.bf16.mxu0 0
    %853 = vmatpush1.bf16.msra.mxu0 0
    %854 = vmatprep.subr.bf16.mxu0 0
    %855 = vmatpush1.bf16.msra.mxu0 0
    %856 = vmatprep.subr.bf16.mxu0 0
    %857 = vmatpush1.bf16.msra.mxu0 0
    %858 = vmatprep.subr.bf16.mxu0 0
    %859 = vmatpush1.bf16.msra.mxu0 0
    %860 = vmatprep.subr.bf16.mxu0 0
    %861 = vmatpush1.bf16.msra.mxu0 0
    %862 = vmatprep.subr.bf16.mxu0 0
    %863 = vmatpush1.bf16.msra.mxu0 0
    %864 = vmatprep.subr.bf16.mxu0 0
    %865 = vmatpush1.bf16.msra.mxu0 0
    %866 = vmatprep.subr.bf16.mxu0 0
    %867 = vmatpush1.bf16.msra.mxu0 0
    %868 = vmatprep.subr.bf16.mxu0 0
    %869 = vmatpush1.bf16.msra.mxu0 0
    %870 = vmatprep.subr.bf16.mxu0 0
    %871 = vmatpush1.bf16.msra.mxu0 0
    %872 = vmatprep.subr.bf16.mxu0 0
    %873 = vmatpush1.bf16.msra.mxu0 0
    %874 = vmatprep.subr.bf16.mxu0 0
    %875 = vmatpush1.bf16.msra.mxu0 0
    %876 = vmatprep.subr.bf16.mxu0 0
    %877 = vmatpush1.bf16.msra.mxu0 0
    %878 = vmatprep.mubr.bf16.mxu0 0
    %879 = vmatmul.mubr.bf16.gmra.mrb[0].mxu0 %v726
    %v880 = vpop.f32.mrb[0].mxu0
    %v881 = vadd.f32 0.0, %v880
    %v882 = vpop.f32.mrb[0].mxu0
    %v883 = vpop.f32.mrb[0].mxu0
    %v884 = vpop.f32.mrb[0].mxu0
    %885 = vdwg.mxu0
    %v886 = vadd.f32 %v845, %v881
    %v887 = vxor.u32 %v886, 2147483648
    %v888 = vmul.f32 %v887, 1.442695
    %v889 = vpow.pop %v888
    %v890 = vadd.f32 %v889, 1.0
    %v891 = vrcp.pop %v890
    %v892 = vmul.f32 1.0, %v891
    %v893 = vtanh.pop %v886
    %v894 = vmul.f32 %v892, %v714
    %896 = vrot.lane.b32.xlu0 %v893, 64
    %v897 = vpop.permute.xlu0 %896
    %v899 = vmul.f32 %v892, %v897
    %901 = vrot.lane.b32.xlu0 %v899, 32
    %v902 = vpop.permute.xlu0 %901
    %v904 = vadd.f32 %v894, %v902
    %v905 = vtanh.pop %v904
    %907 = vrot.lane.b32.xlu0 %v905, 64
    %v908 = vpop.permute.xlu0 %907
    %v910 = vmul.f32 %v892, %v908
    %v911 = vpack.c.bf16 %v910, %v910
    %913 = vrot.lane.b32.xlu0 %v911, 32
    %v914 = vpop.permute.xlu0 %913
    %v916 = vsel %vm230, %v914, 0
    %918 = vmatprep.subr.bf16.mxu0 0
    %919 = vmatpush1.bf16.msra.mxu0 %v43
    %920 = vmatprep.subr.bf16.mxu0 0
    %921 = vmatpush1.bf16.msra.mxu0 %v44
    %922 = vmatprep.subr.bf16.mxu0 0
    %923 = vmatpush1.bf16.msra.mxu0 0
    %924 = vmatprep.subr.bf16.mxu0 0
    %925 = vmatpush1.bf16.msra.mxu0 0
    %926 = vmatprep.subr.bf16.mxu0 0
    %927 = vmatpush1.bf16.msra.mxu0 0
    %928 = vmatprep.subr.bf16.mxu0 0
    %929 = vmatpush1.bf16.msra.mxu0 0
    %930 = vmatprep.subr.bf16.mxu0 0
    %931 = vmatpush1.bf16.msra.mxu0 0
    %932 = vmatprep.subr.bf16.mxu0 0
    %933 = vmatpush1.bf16.msra.mxu0 0
    %934 = vmatprep.subr.bf16.mxu0 0
    %935 = vmatpush1.bf16.msra.mxu0 0
    %936 = vmatprep.subr.bf16.mxu0 0
    %937 = vmatpush1.bf16.msra.mxu0 0
    %938 = vmatprep.subr.bf16.mxu0 0
    %939 = vmatpush1.bf16.msra.mxu0 0
    %940 = vmatprep.subr.bf16.mxu0 0
    %941 = vmatpush1.bf16.msra.mxu0 0
    %942 = vmatprep.subr.bf16.mxu0 0
    %943 = vmatpush1.bf16.msra.mxu0 0
    %944 = vmatprep.subr.bf16.mxu0 0
    %945 = vmatpush1.bf16.msra.mxu0 0
    %946 = vmatprep.subr.bf16.mxu0 0
    %947 = vmatpush1.bf16.msra.mxu0 0
    %948 = vmatprep.subr.bf16.mxu0 0
    %949 = vmatpush1.bf16.msra.mxu0 0
    %950 = vmatprep.mubr.bf16.mxu0 0
    %951 = vmatmul.mubr.bf16.gmra.mrb[0].mxu0 %v916
    %v952 = vpop.f32.mrb[0].mxu0
    %v953 = vadd.f32 0.0, %v952
    %v954 = vpop.f32.mrb[0].mxu0
    %v955 = vpop.f32.mrb[0].mxu0
    %v956 = vpop.f32.mrb[0].mxu0
    %957 = vdwg.mxu0
    %v958 = vadd.f32 %v840, %v953
    %v959 = vxor.u32 %v958, 2147483648
    %v960 = vmul.f32 %v959, 1.442695
    %v961 = vpow.pop %v960
    %v962 = vadd.f32 %v961, 1.0
    %v963 = vrcp.pop %v962
    %v964 = vmul.f32 1.0, %v963
    %v965 = vtanh.pop %v958
    %v966 = vmul.f32 %v964, %v786
    %968 = vrot.lane.b32.xlu0 %v965, 64
    %v969 = vpop.permute.xlu0 %968
    %v971 = vmul.f32 %v964, %v969
    %973 = vrot.lane.b32.xlu0 %v971, 32
    %v974 = vpop.permute.xlu0 %973
    %v976 = vadd.f32 %v966, %v974
    %v977 = vtanh.pop %v976
    %979 = vrot.lane.b32.xlu0 %v977, 64
    %v980 = vpop.permute.xlu0 %979
    %v982 = vmul.f32 %v964, %v980
    %984 = vrot.lane.b32.xlu0 %v982, 32
    %v985 = vpop.permute.xlu0 %984
    %987 = vst.msk [vmem:[#allocation3 + $0x3] sm:$0x1] %vm416, %v985
    %v988 = vpack.c.bf16 %v982, %v982
    %990 = vrot.lane.b32.xlu0 %v988, 32
    %v991 = vpop.permute.xlu0 %990
    %v993 = vsel %vm230, %v991, 0
    %995 = vmatprep.subr.bf16.mxu0 0
    %996 = vmatpush1.bf16.msra.mxu0 %v49
    %997 = vmatprep.subr.bf16.mxu0 0
    %998 = vmatpush1.bf16.msra.mxu0 %v50
    %999 = vmatprep.subr.bf16.mxu0 0
    %1000 = vmatpush1.bf16.msra.mxu0 0
    %1001 = vmatprep.subr.bf16.mxu0 0
    %1002 = vmatpush1.bf16.msra.mxu0 0
    %1003 = vmatprep.subr.bf16.mxu0 0
    %1004 = vmatpush1.bf16.msra.mxu0 0
    %1005 = vmatprep.subr.bf16.mxu0 0
    %1006 = vmatpush1.bf16.msra.mxu0 0
    %1007 = vmatprep.subr.bf16.mxu0 0
    %1008 = vmatpush1.bf16.msra.mxu0 0
    %1009 = vmatprep.subr.bf16.mxu0 0
    %1010 = vmatpush1.bf16.msra.mxu0 0
    %1011 = vmatprep.subr.bf16.mxu0 0
    %1012 = vmatpush1.bf16.msra.mxu0 0
    %1013 = vmatprep.subr.bf16.mxu0 0
    %1014 = vmatpush1.bf16.msra.mxu0 0
    %1015 = vmatprep.subr.bf16.mxu0 0
    %1016 = vmatpush1.bf16.msra.mxu0 0
    %1017 = vmatprep.subr.bf16.mxu0 0
    %1018 = vmatpush1.bf16.msra.mxu0 0
    %1019 = vmatprep.subr.bf16.mxu0 0
    %1020 = vmatpush1.bf16.msra.mxu0 0
    %1021 = vmatprep.subr.bf16.mxu0 0
    %1022 = vmatpush1.bf16.msra.mxu0 0
    %1023 = vmatprep.subr.bf16.mxu0 0
    %1024 = vmatpush1.bf16.msra.mxu0 0
    %1025 = vmatprep.subr.bf16.mxu0 0
    %1026 = vmatpush1.bf16.msra.mxu0 0
    %1027 = vmatprep.mubr.bf16.mxu0 0
    %1028 = vmatmul.mubr.bf16.gmra.mrb[0].mxu0 %v993
    %v1029 = vpop.f32.mrb[0].mxu0
    %v1030 = vadd.f32 %v51, %v1029
    %v1031 = vpop.f32.mrb[0].mxu0
    %v1032 = vpop.f32.mrb[0].mxu0
    %v1033 = vpop.f32.mrb[0].mxu0
    %1034 = vdwg.mxu0
    %v1035 = vld [vmem:[#allocation2 + $0x4] sm:$0x1]
    %1036 = vmatprep.subr.bf16.mxu0 0
    %1037 = vmatpush1.bf16.msra.mxu0 %v36
    %1038 = vmatprep.subr.bf16.mxu0 0
    %1039 = vmatpush1.bf16.msra.mxu0 %v37
    %1040 = vmatprep.subr.bf16.mxu0 0
    %1041 = vmatpush1.bf16.msra.mxu0 0
    %1042 = vmatprep.subr.bf16.mxu0 0
    %1043 = vmatpush1.bf16.msra.mxu0 0
    %1044 = vmatprep.subr.bf16.mxu0 0
    %1045 = vmatpush1.bf16.msra.mxu0 0
    %1046 = vmatprep.subr.bf16.mxu0 0
    %1047 = vmatpush1.bf16.msra.mxu0 0
    %1048 = vmatprep.subr.bf16.mxu0 0
    %1049 = vmatpush1.bf16.msra.mxu0 0
    %1050 = vmatprep.subr.bf16.mxu0 0
    %1051 = vmatpush1.bf16.msra.mxu0 0
    %1052 = vmatprep.subr.bf16.mxu0 0
    %1053 = vmatpush1.bf16.msra.mxu0 0
    %1054 = vmatprep.subr.bf16.mxu0 0
    %1055 = vmatpush1.bf16.msra.mxu0 0
    %1056 = vmatprep.subr.bf16.mxu0 0
    %1057 = vmatpush1.bf16.msra.mxu0 0
    %1058 = vmatprep.subr.bf16.mxu0 0
    %1059 = vmatpush1.bf16.msra.mxu0 0
    %1060 = vmatprep.subr.bf16.mxu0 0
    %1061 = vmatpush1.bf16.msra.mxu0 0
    %1062 = vmatprep.subr.bf16.mxu0 0
    %1063 = vmatpush1.bf16.msra.mxu0 0
    %1064 = vmatprep.subr.bf16.mxu0 0
    %1065 = vmatpush1.bf16.msra.mxu0 0
    %1066 = vmatprep.subr.bf16.mxu0 0
    %1067 = vmatpush1.bf16.msra.mxu0 0
    %1068 = vmatprep.mubr.bf16.mxu0 0
    %1069 = vmatmul.mubr.bf16.gmra.mrb[0].mxu0 %v916
    %v1070 = vpop.f32.mrb[0].mxu0
    %v1071 = vadd.f32 0.0, %v1070
    %v1072 = vpop.f32.mrb[0].mxu0
    %v1073 = vpop.f32.mrb[0].mxu0
    %v1074 = vpop.f32.mrb[0].mxu0
    %1075 = vdwg.mxu0
    %v1076 = vadd.f32 %v1035, %v1071
    %v1077 = vxor.u32 %v1076, 2147483648
    %v1078 = vmul.f32 %v1077, 1.442695
    %v1079 = vpow.pop %v1078
    %v1080 = vadd.f32 %v1079, 1.0
    %v1081 = vrcp.pop %v1080
    %v1082 = vmul.f32 1.0, %v1081
    %v1083 = vtanh.pop %v1076
    %v1084 = vmul.f32 %v1082, %v904
    %1086 = vrot.lane.b32.xlu0 %v1083, 64
    %v1087 = vpop.permute.xlu0 %1086
    %v1089 = vmul.f32 %v1082, %v1087
    %1091 = vrot.lane.b32.xlu0 %v1089, 32
    %v1092 = vpop.permute.xlu0 %1091
    %v1094 = vadd.f32 %v1084, %v1092
    %v1095 = vtanh.pop %v1094
    %1097 = vrot.lane.b32.xlu0 %v1095, 64
    %v1098 = vpop.permute.xlu0 %1097
    %v1100 = vmul.f32 %v1082, %v1098
    %v1101 = vpack.c.bf16 %v1100, %v1100
    %1103 = vrot.lane.b32.xlu0 %v1101, 32
    %v1104 = vpop.permute.xlu0 %1103
    %v1106 = vsel %vm230, %v1104, 0
    %1108 = vmatprep.subr.bf16.mxu0 0
    %1109 = vmatpush1.bf16.msra.mxu0 %v43
    %1110 = vmatprep.subr.bf16.mxu0 0
    %1111 = vmatpush1.bf16.msra.mxu0 %v44
    %1112 = vmatprep.subr.bf16.mxu0 0
    %1113 = vmatpush1.bf16.msra.mxu0 0
    %1114 = vmatprep.subr.bf16.mxu0 0
    %1115 = vmatpush1.bf16.msra.mxu0 0
    %1116 = vmatprep.subr.bf16.mxu0 0
    %1117 = vmatpush1.bf16.msra.mxu0 0
    %1118 = vmatprep.subr.bf16.mxu0 0
    %1119 = vmatpush1.bf16.msra.mxu0 0
    %1120 = vmatprep.subr.bf16.mxu0 0
    %1121 = vmatpush1.bf16.msra.mxu0 0
    %1122 = vmatprep.subr.bf16.mxu0 0
    %1123 = vmatpush1.bf16.msra.mxu0 0
    %1124 = vmatprep.subr.bf16.mxu0 0
    %1125 = vmatpush1.bf16.msra.mxu0 0
    %1126 = vmatprep.subr.bf16.mxu0 0
    %1127 = vmatpush1.bf16.msra.mxu0 0
    %1128 = vmatprep.subr.bf16.mxu0 0
    %1129 = vmatpush1.bf16.msra.mxu0 0
    %1130 = vmatprep.subr.bf16.mxu0 0
    %1131 = vmatpush1.bf16.msra.mxu0 0
    %1132 = vmatprep.subr.bf16.mxu0 0
    %1133 = vmatpush1.bf16.msra.mxu0 0
    %1134 = vmatprep.subr.bf16.mxu0 0
    %1135 = vmatpush1.bf16.msra.mxu0 0
    %1136 = vmatprep.subr.bf16.mxu0 0
    %1137 = vmatpush1.bf16.msra.mxu0 0
    %1138 = vmatprep.subr.bf16.mxu0 0
    %1139 = vmatpush1.bf16.msra.mxu0 0
    %1140 = vmatprep.mubr.bf16.mxu0 0
    %1141 = vmatmul.mubr.bf16.gmra.mrb[0].mxu0 %v1106
    %v1142 = vpop.f32.mrb[0].mxu0
    %v1143 = vadd.f32 0.0, %v1142
    %v1144 = vpop.f32.mrb[0].mxu0
    %v1145 = vpop.f32.mrb[0].mxu0
    %v1146 = vpop.f32.mrb[0].mxu0
    %1147 = vdwg.mxu0
    %v1148 = vadd.f32 %v1030, %v1143
    %v1149 = vxor.u32 %v1148, 2147483648
    %v1150 = vmul.f32 %v1149, 1.442695
    %v1151 = vpow.pop %v1150
    %v1152 = vadd.f32 %v1151, 1.0
    %v1153 = vrcp.pop %v1152
    %v1154 = vmul.f32 1.0, %v1153
    %v1155 = vtanh.pop %v1148
    %v1156 = vmul.f32 %v1154, %v976
    %1158 = vrot.lane.b32.xlu0 %v1155, 64
    %v1159 = vpop.permute.xlu0 %1158
    %v1161 = vmul.f32 %v1154, %v1159
    %1163 = vrot.lane.b32.xlu0 %v1161, 32
    %v1164 = vpop.permute.xlu0 %1163
    %v1166 = vadd.f32 %v1156, %v1164
    %v1167 = vtanh.pop %v1166
    %1169 = vrot.lane.b32.xlu0 %v1167, 64
    %v1170 = vpop.permute.xlu0 %1169
    %v1172 = vmul.f32 %v1154, %v1170
    %1174 = vrot.lane.b32.xlu0 %v1172, 32
    %v1175 = vpop.permute.xlu0 %1174
    %1177 = vst.msk [vmem:[#allocation3 + $0x4] sm:$0x1] %vm416, %v1175
    %v1178 = vpack.c.bf16 %v1172, %v1172
    %1180 = vrot.lane.b32.xlu0 %v1178, 32
    %v1181 = vpop.permute.xlu0 %1180
    %v1183 = vsel %vm230, %v1181, 0
    %1185 = vmatprep.subr.bf16.mxu0 0
    %1186 = vmatpush1.bf16.msra.mxu0 %v49
    %1187 = vmatprep.subr.bf16.mxu0 0
    %1188 = vmatpush1.bf16.msra.mxu0 %v50
    %1189 = vmatprep.subr.bf16.mxu0 0
    %1190 = vmatpush1.bf16.msra.mxu0 0
    %1191 = vmatprep.subr.bf16.mxu0 0
    %1192 = vmatpush1.bf16.msra.mxu0 0
    %1193 = vmatprep.subr.bf16.mxu0 0
    %1194 = vmatpush1.bf16.msra.mxu0 0
    %1195 = vmatprep.subr.bf16.mxu0 0
    %1196 = vmatpush1.bf16.msra.mxu0 0
    %1197 = vmatprep.subr.bf16.mxu0 0
    %1198 = vmatpush1.bf16.msra.mxu0 0
    %1199 = vmatprep.subr.bf16.mxu0 0
    %1200 = vmatpush1.bf16.msra.mxu0 0
    %1201 = vmatprep.subr.bf16.mxu0 0
    %1202 = vmatpush1.bf16.msra.mxu0 0
    %1203 = vmatprep.subr.bf16.mxu0 0
    %1204 = vmatpush1.bf16.msra.mxu0 0
    %1205 = vmatprep.subr.bf16.mxu0 0
    %1206 = vmatpush1.bf16.msra.mxu0 0
    %1207 = vmatprep.subr.bf16.mxu0 0
    %1208 = vmatpush1.bf16.msra.mxu0 0
    %1209 = vmatprep.subr.bf16.mxu0 0
    %1210 = vmatpush1.bf16.msra.mxu0 0
    %1211 = vmatprep.subr.bf16.mxu0 0
    %1212 = vmatpush1.bf16.msra.mxu0 0
    %1213 = vmatprep.subr.bf16.mxu0 0
    %1214 = vmatpush1.bf16.msra.mxu0 0
    %1215 = vmatprep.subr.bf16.mxu0 0
    %1216 = vmatpush1.bf16.msra.mxu0 0
    %1217 = vmatprep.mubr.bf16.mxu0 0
    %1218 = vmatmul.mubr.bf16.gmra.mrb[0].mxu0 %v1183
    %v1219 = vpop.f32.mrb[0].mxu0
    %v1220 = vadd.f32 %v51, %v1219
    %v1221 = vpop.f32.mrb[0].mxu0
    %v1222 = vpop.f32.mrb[0].mxu0
    %v1223 = vpop.f32.mrb[0].mxu0
    %1224 = vdwg.mxu0
    %v1225 = vld [vmem:[#allocation2 + $0x5] sm:$0x1]
    %1226 = vmatprep.subr.bf16.mxu0 0
    %1227 = vmatpush1.bf16.msra.mxu0 %v36
    %1228 = vmatprep.subr.bf16.mxu0 0
    %1229 = vmatpush1.bf16.msra.mxu0 %v37
    %1230 = vmatprep.subr.bf16.mxu0 0
    %1231 = vmatpush1.bf16.msra.mxu0 0
    %1232 = vmatprep.subr.bf16.mxu0 0
    %1233 = vmatpush1.bf16.msra.mxu0 0
    %1234 = vmatprep.subr.bf16.mxu0 0
    %1235 = vmatpush1.bf16.msra.mxu0 0
    %1236 = vmatprep.subr.bf16.mxu0 0
    %1237 = vmatpush1.bf16.msra.mxu0 0
    %1238 = vmatprep.subr.bf16.mxu0 0
    %1239 = vmatpush1.bf16.msra.mxu0 0
    %1240 = vmatprep.subr.bf16.mxu0 0
    %1241 = vmatpush1.bf16.msra.mxu0 0
    %1242 = vmatprep.subr.bf16.mxu0 0
    %1243 = vmatpush1.bf16.msra.mxu0 0
    %1244 = vmatprep.subr.bf16.mxu0 0
    %1245 = vmatpush1.bf16.msra.mxu0 0
    %1246 = vmatprep.subr.bf16.mxu0 0
    %1247 = vmatpush1.bf16.msra.mxu0 0
    %1248 = vmatprep.subr.bf16.mxu0 0
    %1249 = vmatpush1.bf16.msra.mxu0 0
    %1250 = vmatprep.subr.bf16.mxu0 0
    %1251 = vmatpush1.bf16.msra.mxu0 0
    %1252 = vmatprep.subr.bf16.mxu0 0
    %1253 = vmatpush1.bf16.msra.mxu0 0
    %1254 = vmatprep.subr.bf16.mxu0 0
    %1255 = vmatpush1.bf16.msra.mxu0 0
    %1256 = vmatprep.subr.bf16.mxu0 0
    %1257 = vmatpush1.bf16.msra.mxu0 0
    %1258 = vmatprep.mubr.bf16.mxu0 0
    %1259 = vmatmul.mubr.bf16.gmra.mrb[0].mxu0 %v1106
    %v1260 = vpop.f32.mrb[0].mxu0
    %v1261 = vadd.f32 0.0, %v1260
    %v1262 = vpop.f32.mrb[0].mxu0
    %v1263 = vpop.f32.mrb[0].mxu0
    %v1264 = vpop.f32.mrb[0].mxu0
    %1265 = vdwg.mxu0
    %v1266 = vadd.f32 %v1225, %v1261
    %v1267 = vxor.u32 %v1266, 2147483648
    %v1268 = vmul.f32 %v1267, 1.442695
    %v1269 = vpow.pop %v1268
    %v1270 = vadd.f32 %v1269, 1.0
    %v1271 = vrcp.pop %v1270
    %v1272 = vmul.f32 1.0, %v1271
    %v1273 = vtanh.pop %v1266
    %v1274 = vmul.f32 %v1272, %v1094
    %1276 = vrot.lane.b32.xlu0 %v1273, 64
    %v1277 = vpop.permute.xlu0 %1276
    %v1279 = vmul.f32 %v1272, %v1277
    %1281 = vrot.lane.b32.xlu0 %v1279, 32
    %v1282 = vpop.permute.xlu0 %1281
    %v1284 = vadd.f32 %v1274, %v1282
    %v1285 = vtanh.pop %v1284
    %1287 = vrot.lane.b32.xlu0 %v1285, 64
    %v1288 = vpop.permute.xlu0 %1287
    %v1290 = vmul.f32 %v1272, %v1288
    %v1291 = vpack.c.bf16 %v1290, %v1290
    %1293 = vrot.lane.b32.xlu0 %v1291, 32
    %v1294 = vpop.permute.xlu0 %1293
    %v1296 = vsel %vm230, %v1294, 0
    %1298 = vmatprep.subr.bf16.mxu0 0
    %1299 = vmatpush1.bf16.msra.mxu0 %v43
    %1300 = vmatprep.subr.bf16.mxu0 0
    %1301 = vmatpush1.bf16.msra.mxu0 %v44
    %1302 = vmatprep.subr.bf16.mxu0 0
    %1303 = vmatpush1.bf16.msra.mxu0 0
    %1304 = vmatprep.subr.bf16.mxu0 0
    %1305 = vmatpush1.bf16.msra.mxu0 0
    %1306 = vmatprep.subr.bf16.mxu0 0
    %1307 = vmatpush1.bf16.msra.mxu0 0
    %1308 = vmatprep.subr.bf16.mxu0 0
    %1309 = vmatpush1.bf16.msra.mxu0 0
    %1310 = vmatprep.subr.bf16.mxu0 0
    %1311 = vmatpush1.bf16.msra.mxu0 0
    %1312 = vmatprep.subr.bf16.mxu0 0
    %1313 = vmatpush1.bf16.msra.mxu0 0
    %1314 = vmatprep.subr.bf16.mxu0 0
    %1315 = vmatpush1.bf16.msra.mxu0 0
    %1316 = vmatprep.subr.bf16.mxu0 0
    %1317 = vmatpush1.bf16.msra.mxu0 0
    %1318 = vmatprep.subr.bf16.mxu0 0
    %1319 = vmatpush1.bf16.msra.mxu0 0
    %1320 = vmatprep.subr.bf16.mxu0 0
    %1321 = vmatpush1.bf16.msra.mxu0 0
    %1322 = vmatprep.subr.bf16.mxu0 0
    %1323 = vmatpush1.bf16.msra.mxu0 0
    %1324 = vmatprep.subr.bf16.mxu0 0
    %1325 = vmatpush1.bf16.msra.mxu0 0
    %1326 = vmatprep.subr.bf16.mxu0 0
    %1327 = vmatpush1.bf16.msra.mxu0 0
    %1328 = vmatprep.subr.bf16.mxu0 0
    %1329 = vmatpush1.bf16.msra.mxu0 0
    %1330 = vmatprep.mubr.bf16.mxu0 0
    %1331 = vmatmul.mubr.bf16.gmra.mrb[0].mxu0 %v1296
    %v1332 = vpop.f32.mrb[0].mxu0
    %v1333 = vadd.f32 0.0, %v1332
    %v1334 = vpop.f32.mrb[0].mxu0
    %v1335 = vpop.f32.mrb[0].mxu0
    %v1336 = vpop.f32.mrb[0].mxu0
    %1337 = vdwg.mxu0
    %v1338 = vadd.f32 %v1220, %v1333
    %v1339 = vxor.u32 %v1338, 2147483648
    %v1340 = vmul.f32 %v1339, 1.442695
    %v1341 = vpow.pop %v1340
    %v1342 = vadd.f32 %v1341, 1.0
    %v1343 = vrcp.pop %v1342
    %v1344 = vmul.f32 1.0, %v1343
    %v1345 = vtanh.pop %v1338
    %v1346 = vmul.f32 %v1344, %v1166
    %1348 = vrot.lane.b32.xlu0 %v1345, 64
    %v1349 = vpop.permute.xlu0 %1348
    %v1351 = vmul.f32 %v1344, %v1349
    %1353 = vrot.lane.b32.xlu0 %v1351, 32
    %v1354 = vpop.permute.xlu0 %1353
    %v1356 = vadd.f32 %v1346, %v1354
    %v1357 = vtanh.pop %v1356
    %1359 = vrot.lane.b32.xlu0 %v1357, 64
    %v1360 = vpop.permute.xlu0 %1359
    %v1362 = vmul.f32 %v1344, %v1360
    %1364 = vrot.lane.b32.xlu0 %v1362, 32
    %v1365 = vpop.permute.xlu0 %1364
    %1367 = vst.msk [vmem:[#allocation3 + $0x5] sm:$0x1] %vm416, %v1365
    %v1368 = vpack.c.bf16 %v1362, %v1362
    %1370 = vrot.lane.b32.xlu0 %v1368, 32
    %v1371 = vpop.permute.xlu0 %1370
    %v1373 = vsel %vm230, %v1371, 0
    %1375 = vmatprep.subr.bf16.mxu0 0
    %1376 = vmatpush1.bf16.msra.mxu0 %v49
    %1377 = vmatprep.subr.bf16.mxu0 0
    %1378 = vmatpush1.bf16.msra.mxu0 %v50
    %1379 = vmatprep.subr.bf16.mxu0 0
    %1380 = vmatpush1.bf16.msra.mxu0 0
    %1381 = vmatprep.subr.bf16.mxu0 0
    %1382 = vmatpush1.bf16.msra.mxu0 0
    %1383 = vmatprep.subr.bf16.mxu0 0
    %1384 = vmatpush1.bf16.msra.mxu0 0
    %1385 = vmatprep.subr.bf16.mxu0 0
    %1386 = vmatpush1.bf16.msra.mxu0 0
    %1387 = vmatprep.subr.bf16.mxu0 0
    %1388 = vmatpush1.bf16.msra.mxu0 0
    %1389 = vmatprep.subr.bf16.mxu0 0
    %1390 = vmatpush1.bf16.msra.mxu0 0
    %1391 = vmatprep.subr.bf16.mxu0 0
    %1392 = vmatpush1.bf16.msra.mxu0 0
    %1393 = vmatprep.subr.bf16.mxu0 0
    %1394 = vmatpush1.bf16.msra.mxu0 0
    %1395 = vmatprep.subr.bf16.mxu0 0
    %1396 = vmatpush1.bf16.msra.mxu0 0
    %1397 = vmatprep.subr.bf16.mxu0 0
    %1398 = vmatpush1.bf16.msra.mxu0 0
    %1399 = vmatprep.subr.bf16.mxu0 0
    %1400 = vmatpush1.bf16.msra.mxu0 0
    %1401 = vmatprep.subr.bf16.mxu0 0
    %1402 = vmatpush1.bf16.msra.mxu0 0
    %1403 = vmatprep.subr.bf16.mxu0 0
    %1404 = vmatpush1.bf16.msra.mxu0 0
    %1405 = vmatprep.subr.bf16.mxu0 0
    %1406 = vmatpush1.bf16.msra.mxu0 0
    %1407 = vmatprep.mubr.bf16.mxu0 0
    %1408 = vmatmul.mubr.bf16.gmra.mrb[0].mxu0 %v1373
    %v1409 = vpop.f32.mrb[0].mxu0
    %v1410 = vadd.f32 %v51, %v1409
    %v1411 = vpop.f32.mrb[0].mxu0
    %v1412 = vpop.f32.mrb[0].mxu0
    %v1413 = vpop.f32.mrb[0].mxu0
    %1414 = vdwg.mxu0
    %v1415 = vld [vmem:[#allocation2 + $0x6] sm:$0x1]
    %1416 = vmatprep.subr.bf16.mxu0 0
    %1417 = vmatpush1.bf16.msra.mxu0 %v36
    %1418 = vmatprep.subr.bf16.mxu0 0
    %1419 = vmatpush1.bf16.msra.mxu0 %v37
    %1420 = vmatprep.subr.bf16.mxu0 0
    %1421 = vmatpush1.bf16.msra.mxu0 0
    %1422 = vmatprep.subr.bf16.mxu0 0
    %1423 = vmatpush1.bf16.msra.mxu0 0
    %1424 = vmatprep.subr.bf16.mxu0 0
    %1425 = vmatpush1.bf16.msra.mxu0 0
    %1426 = vmatprep.subr.bf16.mxu0 0
    %1427 = vmatpush1.bf16.msra.mxu0 0
    %1428 = vmatprep.subr.bf16.mxu0 0
    %1429 = vmatpush1.bf16.msra.mxu0 0
    %1430 = vmatprep.subr.bf16.mxu0 0
    %1431 = vmatpush1.bf16.msra.mxu0 0
    %1432 = vmatprep.subr.bf16.mxu0 0
    %1433 = vmatpush1.bf16.msra.mxu0 0
    %1434 = vmatprep.subr.bf16.mxu0 0
    %1435 = vmatpush1.bf16.msra.mxu0 0
    %1436 = vmatprep.subr.bf16.mxu0 0
    %1437 = vmatpush1.bf16.msra.mxu0 0
    %1438 = vmatprep.subr.bf16.mxu0 0
    %1439 = vmatpush1.bf16.msra.mxu0 0
    %1440 = vmatprep.subr.bf16.mxu0 0
    %1441 = vmatpush1.bf16.msra.mxu0 0
    %1442 = vmatprep.subr.bf16.mxu0 0
    %1443 = vmatpush1.bf16.msra.mxu0 0
    %1444 = vmatprep.subr.bf16.mxu0 0
    %1445 = vmatpush1.bf16.msra.mxu0 0
    %1446 = vmatprep.subr.bf16.mxu0 0
    %1447 = vmatpush1.bf16.msra.mxu0 0
    %1448 = vmatprep.mubr.bf16.mxu0 0
    %1449 = vmatmul.mubr.bf16.gmra.mrb[0].mxu0 %v1296
    %v1450 = vpop.f32.mrb[0].mxu0
    %v1451 = vadd.f32 0.0, %v1450
    %v1452 = vpop.f32.mrb[0].mxu0
    %v1453 = vpop.f32.mrb[0].mxu0
    %v1454 = vpop.f32.mrb[0].mxu0
    %1455 = vdwg.mxu0
    %v1456 = vadd.f32 %v1415, %v1451
    %v1457 = vxor.u32 %v1456, 2147483648
    %v1458 = vmul.f32 %v1457, 1.442695
    %v1459 = vpow.pop %v1458
    %v1460 = vadd.f32 %v1459, 1.0
    %v1461 = vrcp.pop %v1460
    %v1462 = vmul.f32 1.0, %v1461
    %v1463 = vtanh.pop %v1456
    %v1464 = vmul.f32 %v1462, %v1284
    %1466 = vrot.lane.b32.xlu0 %v1463, 64
    %v1467 = vpop.permute.xlu0 %1466
    %v1469 = vmul.f32 %v1462, %v1467
    %1471 = vrot.lane.b32.xlu0 %v1469, 32
    %v1472 = vpop.permute.xlu0 %1471
    %v1474 = vadd.f32 %v1464, %v1472
    %v1475 = vtanh.pop %v1474
    %1477 = vrot.lane.b32.xlu0 %v1475, 64
    %v1478 = vpop.permute.xlu0 %1477
    %v1480 = vmul.f32 %v1462, %v1478
    %v1481 = vpack.c.bf16 %v1480, %v1480
    %1483 = vrot.lane.b32.xlu0 %v1481, 32
    %v1484 = vpop.permute.xlu0 %1483
    %v1486 = vsel %vm230, %v1484, 0
    %1488 = vmatprep.subr.bf16.mxu0 0
    %1489 = vmatpush1.bf16.msra.mxu0 %v43
    %1490 = vmatprep.subr.bf16.mxu0 0
    %1491 = vmatpush1.bf16.msra.mxu0 %v44
    %1492 = vmatprep.subr.bf16.mxu0 0
    %1493 = vmatpush1.bf16.msra.mxu0 0
    %1494 = vmatprep.subr.bf16.mxu0 0
    %1495 = vmatpush1.bf16.msra.mxu0 0
    %1496 = vmatprep.subr.bf16.mxu0 0
    %1497 = vmatpush1.bf16.msra.mxu0 0
    %1498 = vmatprep.subr.bf16.mxu0 0
    %1499 = vmatpush1.bf16.msra.mxu0 0
    %1500 = vmatprep.subr.bf16.mxu0 0
    %1501 = vmatpush1.bf16.msra.mxu0 0
    %1502 = vmatprep.subr.bf16.mxu0 0
    %1503 = vmatpush1.bf16.msra.mxu0 0
    %1504 = vmatprep.subr.bf16.mxu0 0
    %1505 = vmatpush1.bf16.msra.mxu0 0
    %1506 = vmatprep.subr.bf16.mxu0 0
    %1507 = vmatpush1.bf16.msra.mxu0 0
    %1508 = vmatprep.subr.bf16.mxu0 0
    %1509 = vmatpush1.bf16.msra.mxu0 0
    %1510 = vmatprep.subr.bf16.mxu0 0
    %1511 = vmatpush1.bf16.msra.mxu0 0
    %1512 = vmatprep.subr.bf16.mxu0 0
    %1513 = vmatpush1.bf16.msra.mxu0 0
    %1514 = vmatprep.subr.bf16.mxu0 0
    %1515 = vmatpush1.bf16.msra.mxu0 0
    %1516 = vmatprep.subr.bf16.mxu0 0
    %1517 = vmatpush1.bf16.msra.mxu0 0
    %1518 = vmatprep.subr.bf16.mxu0 0
    %1519 = vmatpush1.bf16.msra.mxu0 0
    %1520 = vmatprep.mubr.bf16.mxu0 0
    %1521 = vmatmul.mubr.bf16.gmra.mrb[0].mxu0 %v1486
    %v1522 = vpop.f32.mrb[0].mxu0
    %v1523 = vadd.f32 0.0, %v1522
    %v1524 = vpop.f32.mrb[0].mxu0
    %v1525 = vpop.f32.mrb[0].mxu0
    %v1526 = vpop.f32.mrb[0].mxu0
    %1527 = vdwg.mxu0
    %v1528 = vadd.f32 %v1410, %v1523
    %v1529 = vxor.u32 %v1528, 2147483648
    %v1530 = vmul.f32 %v1529, 1.442695
    %v1531 = vpow.pop %v1530
    %v1532 = vadd.f32 %v1531, 1.0
    %v1533 = vrcp.pop %v1532
    %v1534 = vmul.f32 1.0, %v1533
    %v1535 = vtanh.pop %v1528
    %v1536 = vmul.f32 %v1534, %v1356
    %1538 = vrot.lane.b32.xlu0 %v1535, 64
    %v1539 = vpop.permute.xlu0 %1538
    %v1541 = vmul.f32 %v1534, %v1539
    %1543 = vrot.lane.b32.xlu0 %v1541, 32
    %v1544 = vpop.permute.xlu0 %1543
    %v1546 = vadd.f32 %v1536, %v1544
    %v1547 = vtanh.pop %v1546
    %1549 = vrot.lane.b32.xlu0 %v1547, 64
    %v1550 = vpop.permute.xlu0 %1549
    %v1552 = vmul.f32 %v1534, %v1550
    %1554 = vrot.lane.b32.xlu0 %v1552, 32
    %v1555 = vpop.permute.xlu0 %1554
    %1557 = vst.msk [vmem:[#allocation3 + $0x6] sm:$0x1] %vm416, %v1555
    %v1558 = vpack.c.bf16 %v1552, %v1552
    %1560 = vrot.lane.b32.xlu0 %v1558, 32
    %v1561 = vpop.permute.xlu0 %1560
    %v1563 = vsel %vm230, %v1561, 0
    %1565 = vmatprep.subr.bf16.mxu0 0
    %1566 = vmatpush1.bf16.msra.mxu0 %v49
    %1567 = vmatprep.subr.bf16.mxu0 0
    %1568 = vmatpush1.bf16.msra.mxu0 %v50
    %1569 = vmatprep.subr.bf16.mxu0 0
    %1570 = vmatpush1.bf16.msra.mxu0 0
    %1571 = vmatprep.subr.bf16.mxu0 0
    %1572 = vmatpush1.bf16.msra.mxu0 0
    %1573 = vmatprep.subr.bf16.mxu0 0
    %1574 = vmatpush1.bf16.msra.mxu0 0
    %1575 = vmatprep.subr.bf16.mxu0 0
    %1576 = vmatpush1.bf16.msra.mxu0 0
    %1577 = vmatprep.subr.bf16.mxu0 0
    %1578 = vmatpush1.bf16.msra.mxu0 0
    %1579 = vmatprep.subr.bf16.mxu0 0
    %1580 = vmatpush1.bf16.msra.mxu0 0
    %1581 = vmatprep.subr.bf16.mxu0 0
    %1582 = vmatpush1.bf16.msra.mxu0 0
    %1583 = vmatprep.subr.bf16.mxu0 0
    %1584 = vmatpush1.bf16.msra.mxu0 0
    %1585 = vmatprep.subr.bf16.mxu0 0
    %1586 = vmatpush1.bf16.msra.mxu0 0
    %1587 = vmatprep.subr.bf16.mxu0 0
    %1588 = vmatpush1.bf16.msra.mxu0 0
    %1589 = vmatprep.subr.bf16.mxu0 0
    %1590 = vmatpush1.bf16.msra.mxu0 0
    %1591 = vmatprep.subr.bf16.mxu0 0
    %1592 = vmatpush1.bf16.msra.mxu0 0
    %1593 = vmatprep.subr.bf16.mxu0 0
    %1594 = vmatpush1.bf16.msra.mxu0 0
    %1595 = vmatprep.subr.bf16.mxu0 0
    %1596 = vmatpush1.bf16.msra.mxu0 0
    %1597 = vmatprep.mubr.bf16.mxu0 0
    %1598 = vmatmul.mubr.bf16.gmra.mrb[0].mxu0 %v1563
    %v1599 = vpop.f32.mrb[0].mxu0
    %v1600 = vadd.f32 %v51, %v1599
    %v1601 = vpop.f32.mrb[0].mxu0
    %v1602 = vpop.f32.mrb[0].mxu0
    %v1603 = vpop.f32.mrb[0].mxu0
    %1604 = vdwg.mxu0
    %v1605 = vld [vmem:[#allocation2 + $0x7] sm:$0x1]
    %1606 = vmatprep.subr.bf16.mxu0 0
    %1607 = vmatpush1.bf16.msra.mxu0 %v36
    %1608 = vmatprep.subr.bf16.mxu0 0
    %1609 = vmatpush1.bf16.msra.mxu0 %v37
    %1610 = vmatprep.subr.bf16.mxu0 0
    %1611 = vmatpush1.bf16.msra.mxu0 0
    %1612 = vmatprep.subr.bf16.mxu0 0
    %1613 = vmatpush1.bf16.msra.mxu0 0
    %1614 = vmatprep.subr.bf16.mxu0 0
    %1615 = vmatpush1.bf16.msra.mxu0 0
    %1616 = vmatprep.subr.bf16.mxu0 0
    %1617 = vmatpush1.bf16.msra.mxu0 0
    %1618 = vmatprep.subr.bf16.mxu0 0
    %1619 = vmatpush1.bf16.msra.mxu0 0
    %1620 = vmatprep.subr.bf16.mxu0 0
    %1621 = vmatpush1.bf16.msra.mxu0 0
    %1622 = vmatprep.subr.bf16.mxu0 0
    %1623 = vmatpush1.bf16.msra.mxu0 0
    %1624 = vmatprep.subr.bf16.mxu0 0
    %1625 = vmatpush1.bf16.msra.mxu0 0
    %1626 = vmatprep.subr.bf16.mxu0 0
    %1627 = vmatpush1.bf16.msra.mxu0 0
    %1628 = vmatprep.subr.bf16.mxu0 0
    %1629 = vmatpush1.bf16.msra.mxu0 0
    %1630 = vmatprep.subr.bf16.mxu0 0
    %1631 = vmatpush1.bf16.msra.mxu0 0
    %1632 = vmatprep.subr.bf16.mxu0 0
    %1633 = vmatpush1.bf16.msra.mxu0 0
    %1634 = vmatprep.subr.bf16.mxu0 0
    %1635 = vmatpush1.bf16.msra.mxu0 0
    %1636 = vmatprep.subr.bf16.mxu0 0
    %1637 = vmatpush1.bf16.msra.mxu0 0
    %1638 = vmatprep.mubr.bf16.mxu0 0
    %1639 = vmatmul.mubr.bf16.gmra.mrb[0].mxu0 %v1486
    %v1640 = vpop.f32.mrb[0].mxu0
    %v1641 = vadd.f32 0.0, %v1640
    %v1642 = vpop.f32.mrb[0].mxu0
    %v1643 = vpop.f32.mrb[0].mxu0
    %v1644 = vpop.f32.mrb[0].mxu0
    %1645 = vdwg.mxu0
    %v1646 = vadd.f32 %v1605, %v1641
    %v1647 = vxor.u32 %v1646, 2147483648
    %v1648 = vmul.f32 %v1647, 1.442695
    %v1649 = vpow.pop %v1648
    %v1650 = vadd.f32 %v1649, 1.0
    %v1651 = vrcp.pop %v1650
    %v1652 = vmul.f32 1.0, %v1651
    %v1653 = vtanh.pop %v1646
    %v1654 = vmul.f32 %v1652, %v1474
    %1656 = vrot.lane.b32.xlu0 %v1653, 64
    %v1657 = vpop.permute.xlu0 %1656
    %v1659 = vmul.f32 %v1652, %v1657
    %1661 = vrot.lane.b32.xlu0 %v1659, 32
    %v1662 = vpop.permute.xlu0 %1661
    %v1664 = vadd.f32 %v1654, %v1662
    %v1665 = vtanh.pop %v1664
    %1667 = vrot.lane.b32.xlu0 %v1665, 64
    %v1668 = vpop.permute.xlu0 %1667
    %v1670 = vmul.f32 %v1652, %v1668
    %v1671 = vpack.c.bf16 %v1670, %v1670
    %1673 = vrot.lane.b32.xlu0 %v1671, 32
    %v1674 = vpop.permute.xlu0 %1673
    %v1676 = vsel %vm230, %v1674, 0
    %1678 = vmatprep.subr.bf16.mxu0 0
    %1679 = vmatpush1.bf16.msra.mxu0 %v43
    %1680 = vmatprep.subr.bf16.mxu0 0
    %1681 = vmatpush1.bf16.msra.mxu0 %v44
    %1682 = vmatprep.subr.bf16.mxu0 0
    %1683 = vmatpush1.bf16.msra.mxu0 0
    %1684 = vmatprep.subr.bf16.mxu0 0
    %1685 = vmatpush1.bf16.msra.mxu0 0
    %1686 = vmatprep.subr.bf16.mxu0 0
    %1687 = vmatpush1.bf16.msra.mxu0 0
    %1688 = vmatprep.subr.bf16.mxu0 0
    %1689 = vmatpush1.bf16.msra.mxu0 0
    %1690 = vmatprep.subr.bf16.mxu0 0
    %1691 = vmatpush1.bf16.msra.mxu0 0
    %1692 = vmatprep.subr.bf16.mxu0 0
    %1693 = vmatpush1.bf16.msra.mxu0 0
    %1694 = vmatprep.subr.bf16.mxu0 0
    %1695 = vmatpush1.bf16.msra.mxu0 0
    %1696 = vmatprep.subr.bf16.mxu0 0
    %1697 = vmatpush1.bf16.msra.mxu0 0
    %1698 = vmatprep.subr.bf16.mxu0 0
    %1699 = vmatpush1.bf16.msra.mxu0 0
    %1700 = vmatprep.subr.bf16.mxu0 0
    %1701 = vmatpush1.bf16.msra.mxu0 0
    %1702 = vmatprep.subr.bf16.mxu0 0
    %1703 = vmatpush1.bf16.msra.mxu0 0
    %1704 = vmatprep.subr.bf16.mxu0 0
    %1705 = vmatpush1.bf16.msra.mxu0 0
    %1706 = vmatprep.subr.bf16.mxu0 0
    %1707 = vmatpush1.bf16.msra.mxu0 0
    %1708 = vmatprep.subr.bf16.mxu0 0
    %1709 = vmatpush1.bf16.msra.mxu0 0
    %1710 = vmatprep.mubr.bf16.mxu0 0
    %1711 = vmatmul.mubr.bf16.gmra.mrb[0].mxu0 %v1676
    %v1712 = vpop.f32.mrb[0].mxu0
    %v1713 = vadd.f32 0.0, %v1712
    %v1714 = vpop.f32.mrb[0].mxu0
    %v1715 = vpop.f32.mrb[0].mxu0
    %v1716 = vpop.f32.mrb[0].mxu0
    %1717 = vdwg.mxu0
    %v1718 = vadd.f32 %v1600, %v1713
    %v1719 = vxor.u32 %v1718, 2147483648
    %v1720 = vmul.f32 %v1719, 1.442695
    %v1721 = vpow.pop %v1720
    %v1722 = vadd.f32 %v1721, 1.0
    %v1723 = vrcp.pop %v1722
    %v1724 = vmul.f32 1.0, %v1723
    %v1725 = vtanh.pop %v1718
    %v1726 = vmul.f32 %v1724, %v1546
    %1728 = vrot.lane.b32.xlu0 %v1725, 64
    %v1729 = vpop.permute.xlu0 %1728
    %v1731 = vmul.f32 %v1724, %v1729
    %1733 = vrot.lane.b32.xlu0 %v1731, 32
    %v1734 = vpop.permute.xlu0 %1733
    %v1736 = vadd.f32 %v1726, %v1734
    %v1737 = vtanh.pop %v1736
    %1739 = vrot.lane.b32.xlu0 %v1737, 64
    %v1740 = vpop.permute.xlu0 %1739
    %v1742 = vmul.f32 %v1724, %v1740
    %1744 = vrot.lane.b32.xlu0 %v1742, 32
    %v1745 = vpop.permute.xlu0 %1744
    %1747 = vst.msk [vmem:[#allocation3 + $0x7] sm:$0x1] %vm416, %v1745
    %v1748 = vld [vmem:[#allocation3] sm:$0xff]
    %v1749 = vlaneseq
    %v1750 = vshrl.u32 %v1749, 7
    %v1751 = vsub.s32 0, %v1750
    %v1752 = vrot.slane %v56, %v1751
    %v1754 = vsel %vm230, %v1748, 0
    %1756 = vmatprep.subr.mxu0 0.0
    %1757 = vmatpush1.msra.mxu0 %v52
    %1758 = vmatprep.subr.mxu0 0.0
    %1759 = vmatpush1.msra.mxu0 %v53
    %1760 = vmatprep.subr.mxu0 0.0
    %1761 = vmatpush1.msra.mxu0 %v54
    %1762 = vmatprep.subr.mxu0 0.0
    %1763 = vmatpush1.msra.mxu0 %v55
    %1764 = vmatprep.subr.mxu0 0.0
    %1765 = vmatpush1.msra.mxu0 0.0
    %1766 = vmatprep.subr.mxu0 0.0
    %1767 = vmatpush1.msra.mxu0 0.0
    %1768 = vmatprep.subr.mxu0 0.0
    %1769 = vmatpush1.msra.mxu0 0.0
    %1770 = vmatprep.subr.mxu0 0.0
    %1771 = vmatpush1.msra.mxu0 0.0
    %1772 = vmatprep.subr.mxu0 0.0
    %1773 = vmatpush1.msra.mxu0 0.0
    %1774 = vmatprep.subr.mxu0 0.0
    %1775 = vmatpush1.msra.mxu0 0.0
    %1776 = vmatprep.subr.mxu0 0.0
    %1777 = vmatpush1.msra.mxu0 0.0
    %1778 = vmatprep.subr.mxu0 0.0
    %1779 = vmatpush1.msra.mxu0 0.0
    %1780 = vmatprep.subr.mxu0 0.0
    %1781 = vmatpush1.msra.mxu0 0.0
    %1782 = vmatprep.subr.mxu0 0.0
    %1783 = vmatpush1.msra.mxu0 0.0
    %1784 = vmatprep.subr.mxu0 0.0
    %1785 = vmatpush1.msra.mxu0 0.0
    %1786 = vmatprep.subr.mxu0 0.0
    %1787 = vmatpush1.msra.mxu0 0.0
    %1788 = vmatprep.subr.mxu0 0.0
    %1789 = vmatpush1.msra.mxu0 0.0
    %1790 = vmatprep.subr.mxu0 0.0
    %1791 = vmatpush1.msra.mxu0 0.0
    %1792 = vmatprep.subr.mxu0 0.0
    %1793 = vmatpush1.msra.mxu0 0.0
    %1794 = vmatprep.subr.mxu0 0.0
    %1795 = vmatpush1.msra.mxu0 0.0
    %1796 = vmatprep.subr.mxu0 0.0
    %1797 = vmatpush1.msra.mxu0 0.0
    %1798 = vmatprep.subr.mxu0 0.0
    %1799 = vmatpush1.msra.mxu0 0.0
    %1800 = vmatprep.subr.mxu0 0.0
    %1801 = vmatpush1.msra.mxu0 0.0
    %1802 = vmatprep.subr.mxu0 0.0
    %1803 = vmatpush1.msra.mxu0 0.0
    %1804 = vmatprep.subr.mxu0 0.0
    %1805 = vmatpush1.msra.mxu0 0.0
    %1806 = vmatprep.subr.mxu0 0.0
    %1807 = vmatpush1.msra.mxu0 0.0
    %1808 = vmatprep.subr.mxu0 0.0
    %1809 = vmatpush1.msra.mxu0 0.0
    %1810 = vmatprep.subr.mxu0 0.0
    %1811 = vmatpush1.msra.mxu0 0.0
    %1812 = vmatprep.subr.mxu0 0.0
    %1813 = vmatpush1.msra.mxu0 0.0
    %1814 = vmatprep.subr.mxu0 0.0
    %1815 = vmatpush1.msra.mxu0 0.0
    %1816 = vmatprep.subr.mxu0 0.0
    %1817 = vmatpush1.msra.mxu0 0.0
    %1818 = vmatprep.subr.mxu0 0.0
    %1819 = vmatpush1.msra.mxu0 0.0
    %1820 = vmatprep.mubr.f32.mxu0 0.0
    %1821 = vmatmul.mubr.f32.gmra.mrb[0].mxu0 %v1754
    %v1822 = vpop.f32.mrb[0].mxu0
    %v1823 = vadd.f32 %v1752, %v1822
    %v1824 = vpop.f32.mrb[0].mxu0
    %1825 = vdwg.mxu0
    %vm1826 = vcmask 64512
    %v1827 = vsel %vm1826, %v1823, -inf
    %1828 = vmax.xlane.f32.xlu0 %v1827
    %v1829 = vpop.xlane.xlu0 %1828
    %v1830 = vsub.f32 %v1823, %v1829
    %v1831 = vmul.f32 %v1830, 1.442695
    %v1832 = vpow.pop %v1831
    %v1833 = vsel %vm1826, %v1832, 0.0
    %1834 = vadd.xlane.f32.xlu0 %v1833
    %v1835 = vpop.xlane.xlu0 %1834
    %v1836 = vrcp.pop %v1835
    %v1837 = vmul.f32 %v1832, %v1836
    %1838 = vst.msk [vmem:[#allocation7] sm:$0xff] %vm1826, %v1837
    // Predicated region
    $region18: #{comb_forward.1} parent=1 // pred_check
      _
    $region19: #{comb_forward.1} parent=1 // pred_check_branch
      %1840 = sbr.rel (0) target = $region21
    $region20: #{comb_forward.1} parent=1 // pred_region
      %s1842 = ssub.s32 128, 128
      %1843 = vsyncadd [#allocation6], %s1842
      %s1845 = sshll.u32 [#allocation7], 4
      %s1846 = int_to_ptr.vmem [resolvable:$true] %s1845
      %1848 = dma.vmem_to_hbm [thread:$0]  %s1846, 128, %s3, [#allocation6]
    $region21: #{comb_forward.1} parent=1 // pred_fallthru
      _
    // Predicated region
    $region22: #{comb_forward.1} parent=1 // pred_check
      _
    $region23: #{comb_forward.1} parent=1 // pred_check_branch
      %1850 = sbr.rel (0) target = $region25
    $region24: #{comb_forward.1} parent=1 // pred_region
      %1851 = dma.done [#allocation6], 128
    $region25: #{comb_forward.1} parent=1 // pred_fallthru
      _
    %1852 = vsyncpa [#allocation5], 1
    %1853 = vsyncpa [#allocation6], 1

</llo_original>
